<compile_context>
chip_gen: v7x
topology: tpu7x:2x2x1
jax: 0.10.0
libtpu: 0.0.40
codegen_flags: <defaults>
</compile_context>

<pallas_src>
import jax
import jax.numpy as jnp
from jax.experimental import pallas as pl
from jax.experimental.pallas import tpu as pltpu


def _round_up(x, m):
    return (x + m - 1) // m * m


# ----------------------------- Pallas kernel ------------------------------- #

def _make_fused_gru_kernel(num_layers, T, Bp, Gw, Hw, H, packed):
    """Fused kernel: all GRU layers + the final FC in one pallas_call.

    Ref layout (inputs, then outputs, then scratch):
      refs[0]              : x        (T*Bp, Dp)   time-major, bf16
      refs[1+4l+0]         : W_ih_l   (Dp|Hw, Gw)  bf16, gate-blocked
      refs[1+4l+1]         : W_hh_l   (Hw, Gw)     bf16
      refs[1+4l+2]         : b_rzn_l  (1, Gw)      f32 (b_ih + b_hh folded for r/z)
      refs[1+4l+3]         : b_hn_l   (1, Gw)      f32 (hidden bias of n gate only)
      refs[1+4L+0]         : W_fc     (Hw, Op)     bf16
      refs[1+4L+1]         : b_fc     (1, Op)      f32
      refs[1+4L+2]         : out      (Bp, Op)
      refs[1+4L+3]         : gx scratch  (T*Bp, Gw) f32
      refs[1+4L+4]         : seq scratch (T*Bp, Hw) bf16 (inter-layer activations)
    """
    r_shift = 64          # r block -> n/h block; 64 on 128 lanes is direction-symmetric
    z_shift = 64 - H      # z (or its mirror duplicate) -> n/h block

    def kernel(*refs):
        wfc_ref = refs[1 + 4 * num_layers]
        bfc_ref = refs[2 + 4 * num_layers]
        out_ref = refs[3 + 4 * num_layers]
        gx_scr = refs[4 + 4 * num_layers]
        seq_scr = refs[5 + 4 * num_layers]

        h = jnp.zeros((Bp, Hw), jnp.float32)

        for l in range(num_layers):
            base = 1 + 4 * l
            wih_ref = refs[base]
            whh_ref = refs[base + 1]
            b_rzn = refs[base + 2][...]                 # (1, Gw) f32
            b_hn = refs[base + 3][...]                  # (1, Gw) f32

            # Hoisted, time-parallel input projection for all timesteps at once,
            # staged straight into VMEM scratch (never live across the loop).
            x_in = refs[0][...] if l == 0 else seq_scr[...]          # bf16
            gx_scr[...] = (
                jnp.dot(x_in, wih_ref[...], preferred_element_type=jnp.float32)
                + b_rzn
            )

            # Hoist the bias broadcast out of the serial loop (no CSE of
            # broadcast_in_dim across iterations).
            if packed:
                b_hn_b = jnp.broadcast_to(b_hn, (Bp, Gw))
            else:
                b_hn_b = jnp.broadcast_to(b_hn[:, 2 * Hw:], (Bp, Hw))

            h = jnp.zeros((Bp, Hw), jnp.float32)
            last_layer = l == num_layers - 1

            # Serial recurrence; T is static & small -> fully unrolled.
            # TODO(synk): for large T switch to lax.fori_loop(..., unroll=k).
            for t in range(T):
                gx = gx_scr[pl.ds(t * Bp, Bp), :]        # (Bp, Gw) f32, from VMEM
                gh = jnp.dot(h.astype(jnp.bfloat16), whh_ref[...],
                             preferred_element_type=jnp.float32)     # (Bp, Gw)
                if packed:
                    # r at lanes [0,H), z at [H,2H) (dup at [128-H,128)),
                    # n and h at lanes [64, 64+H).
                    s = jax.nn.sigmoid(gx + gh)                       # r, z lanes valid
                    r_n = pltpu.roll(s, shift=r_shift, axis=1)        # r -> n/h lanes
                    z_n = pltpu.roll(s, shift=z_shift, axis=1)        # z -> n/h lanes
                    n = jnp.tanh(gx + r_n * (gh + b_hn_b))            # valid at n/h lanes
                    h = n + z_n * (h - n)                             # valid at n/h lanes
                else:
                    # Per-gate lane-aligned layout (each gate padded to Hw=128k).
                    r = jax.nn.sigmoid(gx[:, :Hw] + gh[:, :Hw])
                    z = jax.nn.sigmoid(gx[:, Hw:2 * Hw] + gh[:, Hw:2 * Hw])
                    n = jnp.tanh(gx[:, 2 * Hw:] + r * (gh[:, 2 * Hw:] + b_hn_b))
                    h = n + z * (h - n)
                if not last_layer:
                    seq_scr[pl.ds(t * Bp, Bp), :] = h.astype(jnp.bfloat16)

        # Final fully-connected layer fused in; lane-dense (Op = 128k) output.
        out = (jnp.dot(h.astype(jnp.bfloat16), wfc_ref[...],
                       preferred_element_type=jnp.float32) + bfc_ref[...])
        out_ref[...] = out.astype(out_ref.dtype)

    return kernel


# ----------------------------- parameter prep ------------------------------- #

def _place_gate_mat(w, H, placements, n_rows, row_off, n_cols):
    """PyTorch gate-stacked (3H, din) weight -> (n_rows, n_cols) f32.

    Each gate's transposed (din, H) block is placed at rows
    [row_off, row_off+din) and the lane offset given by `placements`
    (a gate may be placed more than once, e.g. the z duplicate)."""
    din = w.shape[1]
    wg = jnp.transpose(w.reshape(3, H, din), (0, 2, 1))   # (gate, din, H)
    out = jnp.zeros((n_rows, n_cols), jnp.float32)
    for g, off in placements:
        out = out.at[row_off:row_off + din, off:off + H].set(wg[g])
    return out


def _place_gate_vec(v, H, placements, n_cols):
    vg = v.reshape(3, H)
    out = jnp.zeros((1, n_cols), jnp.float32)
    for g, off in placements:
        out = out.at[0, off:off + H].set(vg[g])
    return out


@jax.jit
def gru_model_forward(x, gru_params, w_fc, b_fc):
    """GRUModel.forward: x (B, T, Din) -> (B, output_dim)."""
    B, T, Din = x.shape
    H = gru_params[0][1].shape[1]            # w_hh: (3H, H)
    O = w_fc.shape[0]
    L = len(gru_params)

    packed = H <= 32                          # r | z | n | z-dup fit in one 128-lane tile
    if packed:
        Hw = Gw = 128
        h_off = 64                            # h (and the n gate) live at lanes [64, 64+H)
        placements = ((0, 0), (1, H), (2, h_off), (1, 128 - H))
    else:
        Hw = _round_up(H, 128)                # lane-align each gate
        Gw = 3 * Hw
        h_off = 0
        placements = ((0, 0), (1, Hw), (2, 2 * Hw))
    n_off = placements[2][1]

    Bp = _round_up(B, 8)                      # sublane-align batch
    Dp = _round_up(Din, 128)                  # lane-pad raw input features
    Op = _round_up(O, 128)                    # lane-dense FC output

    # time-major, batch/lane padded, flattened to (T*Bp, Dp), bf16 matmul operand.
    xt = jnp.transpose(x, (1, 0, 2))
    xt = jnp.pad(xt, ((0, 0), (0, Bp - B), (0, Dp - Din)))
    x2d = xt.reshape(T * Bp, Dp).astype(jnp.bfloat16)

    kernel_inputs = [x2d]
    for li, (w_ih, w_hh, b_ih, b_hh) in enumerate(gru_params):
        if li == 0:
            rows_ih, roff_ih = Dp, 0
        else:
            rows_ih, roff_ih = Hw, h_off      # next-layer input is h at lanes [h_off, h_off+H)
        wih_p = _place_gate_mat(w_ih, H, placements, rows_ih, roff_ih, Gw).astype(jnp.bfloat16)
        whh_p = _place_gate_mat(w_hh, H, placements, Hw, h_off, Gw).astype(jnp.bfloat16)
        # Fold b_hh into b_ih for r/z gates; keep b_hn separate (inside r*(...)).
        b_comb = jnp.concatenate([b_ih[:2 * H] + b_hh[:2 * H], b_ih[2 * H:]])
        b_rzn_p = _place_gate_vec(b_comb, H, placements, Gw)
        b_hn_p = jnp.zeros((1, Gw), jnp.float32).at[0, n_off:n_off + H].set(b_hh[2 * H:])
        kernel_inputs += [wih_p, whh_p, b_rzn_p, b_hn_p]

    wfc_p = (jnp.zeros((Hw, Op), jnp.float32)
             .at[h_off:h_off + H, :O].set(jnp.transpose(w_fc))
             .astype(jnp.bfloat16))
    bfc_p = jnp.zeros((1, Op), jnp.float32).at[0, :O].set(b_fc)
    kernel_inputs += [wfc_p, bfc_p]

    kernel = _make_fused_gru_kernel(L, T, Bp, Gw, Hw, H, packed)

    scratch_shapes = [
        pltpu.VMEM((T * Bp, Gw), jnp.float32),     # staged gx for the current layer
        pltpu.VMEM((T * Bp, Hw), jnp.bfloat16),    # inter-layer activations
    ]

    # VMEM budget from the actually resident buffers (+2x headroom, 16..64 MiB clamp).
    resident = sum(int(a.size) * a.dtype.itemsize for a in kernel_inputs)
    resident += Bp * Op * x.dtype.itemsize
    resident += T * Bp * Gw * 4 + T * Bp * Hw * 2
    vmem_limit = int(min(64 << 20, max(16 << 20, 2 * resident + (2 << 20))))

    out_p = pl.pallas_call(
        kernel,
        out_shape=jax.ShapeDtypeStruct((Bp, Op), x.dtype),
        in_specs=[pl.BlockSpec(memory_space=pltpu.MemorySpace.VMEM)] * len(kernel_inputs),
        out_specs=pl.BlockSpec(memory_space=pltpu.MemorySpace.VMEM),
        scratch_shapes=scratch_shapes,
        compiler_params=pltpu.CompilerParams(vmem_limit_bytes=vmem_limit),
    )(*kernel_inputs)
    return out_p[:B, :O]


# ----------------------------- pure-JAX reference --------------------------- #

def _gru_layer_ref(x_btD, w_ih, w_hh, b_ih, b_hh):
    B, T, D = x_btD.shape
    H = w_hh.shape[1]

    def step(h, x_t):
        gx = x_t @ w_ih.T + b_ih
        gh = h @ w_hh.T + b_hh
        r = jax.nn.sigmoid(gx[:, :H] + gh[:, :H])
        z = jax.nn.sigmoid(gx[:, H:2 * H] + gh[:, H:2 * H])
        n = jnp.tanh(gx[:, 2 * H:] + r * gh[:, 2 * H:])
        h_new = (1.0 - z) * n + z * h
        return h_new, h_new

    h0 = jnp.zeros((B, H), x_btD.dtype)
    _, outs = jax.lax.scan(step, h0, jnp.transpose(x_btD, (1, 0, 2)))
    return jnp.transpose(outs, (1, 0, 2))


def gru_model_ref(x, gru_params, w_fc, b_fc):
    h = x
    for (w_ih, w_hh, b_ih, b_hh) in gru_params:
        h = _gru_layer_ref(h, w_ih, w_hh, b_ih, b_hh)
    return h[:, -1, :] @ w_fc.T + b_fc


# ---------------------------------- main ------------------------------------ #

if __name__ == "__main__":
    batch, seq_len = 4, 8
    input_dim, hidden_dim, output_dim = 8, 32, 4
    layer_dim = 2
    dtype = jnp.float32

    key = jax.random.PRNGKey(0)
    k_x, key = jax.random.split(key)
    x = jax.random.normal(k_x, (batch, seq_len, input_dim), dtype=dtype)

    # PyTorch-style init: U(-1/sqrt(H), 1/sqrt(H)).
    bound = 1.0 / jnp.sqrt(jnp.float32(hidden_dim))
    gru_params = []
    for layer in range(layer_dim):
        din = input_dim if layer == 0 else hidden_dim
        k1, k2, k3, k4, key = jax.random.split(key, 5)
        w_ih = jax.random.uniform(k1, (3 * hidden_dim, din), dtype, -bound, bound)
        w_hh = jax.random.uniform(k2, (3 * hidden_dim, hidden_dim), dtype, -bound, bound)
        b_ih = jax.random.uniform(k3, (3 * hidden_dim,), dtype, -bound, bound)
        b_hh = jax.random.uniform(k4, (3 * hidden_dim,), dtype, -bound, bound)
        gru_params.append((w_ih, w_hh, b_ih, b_hh))

    k5, k6, key = jax.random.split(key, 3)
    w_fc = jax.random.uniform(k5, (output_dim, hidden_dim), dtype, -bound, bound)
    b_fc = jax.random.uniform(k6, (output_dim,), dtype, -bound, bound)

    out = gru_model_forward(x, gru_params, w_fc, b_fc)
    out = jax.block_until_ready(out)

    ref = gru_model_ref(x, gru_params, w_fc, b_fc)
    assert out.shape == (batch, output_dim), out.shape
    # bf16 matmul operands (f32 accumulation) -> relaxed tolerance per perf review.
    max_err = float(jnp.max(jnp.abs(out - ref)))
    assert jnp.allclose(out, ref, rtol=3e-2, atol=3e-2), f"mismatch: max abs err {max_err}"

    print("KERNEL_OK")
</pallas_src>

<mosaic_0001>
module attributes {stable_mosaic.version = 11 : i64} {
  func.func @kernel(%arg0: memref<64x128xbf16, #tpu.memory_space<vmem>>, %arg1: memref<128x128xbf16, #tpu.memory_space<vmem>>, %arg2: memref<128x128xbf16, #tpu.memory_space<vmem>>, %arg3: memref<1x128xf32, #tpu.memory_space<vmem>>, %arg4: memref<1x128xf32, #tpu.memory_space<vmem>>, %arg5: memref<128x128xbf16, #tpu.memory_space<vmem>>, %arg6: memref<128x128xbf16, #tpu.memory_space<vmem>>, %arg7: memref<1x128xf32, #tpu.memory_space<vmem>>, %arg8: memref<1x128xf32, #tpu.memory_space<vmem>>, %arg9: memref<128x128xbf16, #tpu.memory_space<vmem>>, %arg10: memref<1x128xf32, #tpu.memory_space<vmem>>, %arg11: memref<8x128xf32, #tpu.memory_space<vmem>>, %arg12: memref<64x128xf32, #tpu.memory_space<vmem>>, %arg13: memref<64x128xbf16, #tpu.memory_space<vmem>>) attributes {dimension_semantics = [], scalar_prefetch = 0 : i64, scratch_operands = 2 : i64, tpu.core_type = #tpu.core_type<tc>} {
    %c0 = arith.constant 0 : index
    %c0_0 = arith.constant 0 : index
    %0 = vector.load %arg3[%c0, %c0_0] : memref<1x128xf32, #tpu.memory_space<vmem>>, vector<1x128xf32>
    %c0_1 = arith.constant 0 : index
    %c0_2 = arith.constant 0 : index
    %1 = vector.load %arg4[%c0_1, %c0_2] : memref<1x128xf32, #tpu.memory_space<vmem>>, vector<1x128xf32>
    %c0_3 = arith.constant 0 : index
    %c0_4 = arith.constant 0 : index
    %2 = vector.load %arg0[%c0_3, %c0_4] : memref<64x128xbf16, #tpu.memory_space<vmem>>, vector<64x128xbf16>
    %c0_5 = arith.constant 0 : index
    %c0_6 = arith.constant 0 : index
    %3 = vector.load %arg1[%c0_5, %c0_6] : memref<128x128xbf16, #tpu.memory_space<vmem>>, vector<128x128xbf16>
    %cst = arith.constant dense<0.000000e+00> : vector<64x128xf32>
    %4 = tpu.matmul %2, %3, %cst {dimension_numbers = #tpu.dot_dimension_numbers<[1], [0], [0], [1], [0, 0, 1, 1], [], []>} : vector<64x128xbf16>, vector<128x128xbf16>, vector<64x128xf32> -> vector<64x128xf32>
    %5 = vector.broadcast %0 : vector<1x128xf32> to vector<64x128xf32>
    %6 = arith.addf %4, %5 : vector<64x128xf32>
    %c0_7 = arith.constant 0 : index
    %c0_8 = arith.constant 0 : index
    %7 = vector.load %arg12[%c0_7, %c0_8] : memref<64x128xf32, #tpu.memory_space<vmem>>, vector<64x128xf32>
    tpu.vector_store %arg12[%c0_7, %c0_8], %6 {strides = array<i32>} : memref<64x128xf32, #tpu.memory_space<vmem>>, vector<64x128xf32>,
    %8 = vector.shape_cast %1 : vector<1x128xf32> to vector<1x128xf32>
    %9 = vector.broadcast %8 : vector<1x128xf32> to vector<8x128xf32>
    %cst_9 = arith.constant 0.000000e+00 : f32
    %10 = vector.broadcast %cst_9 : f32 to vector<8x128xf32>
    %c0_10 = arith.constant 0 : index
    %c0_11 = arith.constant 0 : index
    %11 = vector.load %arg12[%c0_10, %c0_11] : memref<64x128xf32, #tpu.memory_space<vmem>>, vector<8x128xf32>
    %12 = arith.truncf %10 : vector<8x128xf32> to vector<8x128xbf16>
    %c0_12 = arith.constant 0 : index
    %c0_13 = arith.constant 0 : index
    %13 = vector.load %arg2[%c0_12, %c0_13] : memref<128x128xbf16, #tpu.memory_space<vmem>>, vector<128x128xbf16>
    %cst_14 = arith.constant dense<0.000000e+00> : vector<8x128xf32>
    %14 = tpu.matmul %12, %13, %cst_14 {dimension_numbers = #tpu.dot_dimension_numbers<[1], [0], [0], [1], [0, 0, 1, 1], [], []>} : vector<8x128xbf16>, vector<128x128xbf16>, vector<8x128xf32> -> vector<8x128xf32>
    %15 = arith.addf %11, %14 : vector<8x128xf32>
    %16 = arith.negf %15 : vector<8x128xf32>
    %17 = math.exp %16 : vector<8x128xf32>
    %cst_15 = arith.constant 1.000000e+00 : f32
    %18 = vector.broadcast %cst_15 : f32 to vector<8x128xf32>
    %19 = arith.addf %18, %17 : vector<8x128xf32>
    %20 = arith.divf %18, %19 : vector<8x128xf32>
    %c64_i32 = arith.constant 64 : i32
    %21 = tpu.dynamic_rotate %20 by %c64_i32 dim 1 : vector<8x128xf32>, i32 -> vector<8x128xf32>
    %c32_i32 = arith.constant 32 : i32
    %22 = tpu.dynamic_rotate %20 by %c32_i32 dim 1 : vector<8x128xf32>, i32 -> vector<8x128xf32>
    %23 = arith.addf %14, %9 : vector<8x128xf32>
    %24 = arith.mulf %21, %23 : vector<8x128xf32>
    %25 = arith.addf %11, %24 : vector<8x128xf32>
    %26 = math.tanh %25 : vector<8x128xf32>
    %27 = arith.subf %10, %26 : vector<8x128xf32>
    %28 = arith.mulf %22, %27 : vector<8x128xf32>
    %29 = arith.addf %26, %28 : vector<8x128xf32>
    %30 = arith.truncf %29 : vector<8x128xf32> to vector<8x128xbf16>
    %c0_16 = arith.constant 0 : index
    %c0_17 = arith.constant 0 : index
    %31 = vector.load %arg13[%c0_16, %c0_17] : memref<64x128xbf16, #tpu.memory_space<vmem>>, vector<8x128xbf16>
    tpu.vector_store %arg13[%c0_16, %c0_17], %30 {strides = array<i32>} : memref<64x128xbf16, #tpu.memory_space<vmem>>, vector<8x128xbf16>,
    %c8 = arith.constant 8 : index
    %c0_18 = arith.constant 0 : index
    %32 = vector.load %arg12[%c8, %c0_18] : memref<64x128xf32, #tpu.memory_space<vmem>>, vector<8x128xf32>
    %33 = arith.truncf %29 : vector<8x128xf32> to vector<8x128xbf16>
    %c0_19 = arith.constant 0 : index
    %c0_20 = arith.constant 0 : index
    %34 = vector.load %arg2[%c0_19, %c0_20] : memref<128x128xbf16, #tpu.memory_space<vmem>>, vector<128x128xbf16>
    %cst_21 = arith.constant dense<0.000000e+00> : vector<8x128xf32>
    %35 = tpu.matmul %33, %34, %cst_21 {dimension_numbers = #tpu.dot_dimension_numbers<[1], [0], [0], [1], [0, 0, 1, 1], [], []>} : vector<8x128xbf16>, vector<128x128xbf16>, vector<8x128xf32> -> vector<8x128xf32>
    %36 = arith.addf %32, %35 : vector<8x128xf32>
    %37 = arith.negf %36 : vector<8x128xf32>
    %38 = math.exp %37 : vector<8x128xf32>
    %cst_22 = arith.constant 1.000000e+00 : f32
    %39 = vector.broadcast %cst_22 : f32 to vector<8x128xf32>
    %40 = arith.addf %39, %38 : vector<8x128xf32>
    %41 = arith.divf %39, %40 : vector<8x128xf32>
    %c64_i32_23 = arith.constant 64 : i32
    %42 = tpu.dynamic_rotate %41 by %c64_i32_23 dim 1 : vector<8x128xf32>, i32 -> vector<8x128xf32>
    %c32_i32_24 = arith.constant 32 : i32
    %43 = tpu.dynamic_rotate %41 by %c32_i32_24 dim 1 : vector<8x128xf32>, i32 -> vector<8x128xf32>
    %44 = arith.addf %35, %9 : vector<8x128xf32>
    %45 = arith.mulf %42, %44 : vector<8x128xf32>
    %46 = arith.addf %32, %45 : vector<8x128xf32>
    %47 = math.tanh %46 : vector<8x128xf32>
    %48 = arith.subf %29, %47 : vector<8x128xf32>
    %49 = arith.mulf %43, %48 : vector<8x128xf32>
    %50 = arith.addf %47, %49 : vector<8x128xf32>
    %51 = arith.truncf %50 : vector<8x128xf32> to vector<8x128xbf16>
    %c8_25 = arith.constant 8 : index
    %c0_26 = arith.constant 0 : index
    %52 = vector.load %arg13[%c8_25, %c0_26] : memref<64x128xbf16, #tpu.memory_space<vmem>>, vector<8x128xbf16>
    tpu.vector_store %arg13[%c8_25, %c0_26], %51 {strides = array<i32>} : memref<64x128xbf16, #tpu.memory_space<vmem>>, vector<8x128xbf16>,
    %c16 = arith.constant 16 : index
    %c0_27 = arith.constant 0 : index
    %53 = vector.load %arg12[%c16, %c0_27] : memref<64x128xf32, #tpu.memory_space<vmem>>, vector<8x128xf32>
    %54 = arith.truncf %50 : vector<8x128xf32> to vector<8x128xbf16>
    %c0_28 = arith.constant 0 : index
    %c0_29 = arith.constant 0 : index
    %55 = vector.load %arg2[%c0_28, %c0_29] : memref<128x128xbf16, #tpu.memory_space<vmem>>, vector<128x128xbf16>
    %cst_30 = arith.constant dense<0.000000e+00> : vector<8x128xf32>
    %56 = tpu.matmul %54, %55, %cst_30 {dimension_numbers = #tpu.dot_dimension_numbers<[1], [0], [0], [1], [0, 0, 1, 1], [], []>} : vector<8x128xbf16>, vector<128x128xbf16>, vector<8x128xf32> -> vector<8x128xf32>
    %57 = arith.addf %53, %56 : vector<8x128xf32>
    %58 = arith.negf %57 : vector<8x128xf32>
    %59 = math.exp %58 : vector<8x128xf32>
    %cst_31 = arith.constant 1.000000e+00 : f32
    %60 = vector.broadcast %cst_31 : f32 to vector<8x128xf32>
    %61 = arith.addf %60, %59 : vector<8x128xf32>
    %62 = arith.divf %60, %61 : vector<8x128xf32>
    %c64_i32_32 = arith.constant 64 : i32
    %63 = tpu.dynamic_rotate %62 by %c64_i32_32 dim 1 : vector<8x128xf32>, i32 -> vector<8x128xf32>
    %c32_i32_33 = arith.constant 32 : i32
    %64 = tpu.dynamic_rotate %62 by %c32_i32_33 dim 1 : vector<8x128xf32>, i32 -> vector<8x128xf32>
    %65 = arith.addf %56, %9 : vector<8x128xf32>
    %66 = arith.mulf %63, %65 : vector<8x128xf32>
    %67 = arith.addf %53, %66 : vector<8x128xf32>
    %68 = math.tanh %67 : vector<8x128xf32>
    %69 = arith.subf %50, %68 : vector<8x128xf32>
    %70 = arith.mulf %64, %69 : vector<8x128xf32>
    %71 = arith.addf %68, %70 : vector<8x128xf32>
    %72 = arith.truncf %71 : vector<8x128xf32> to vector<8x128xbf16>
    %c16_34 = arith.constant 16 : index
    %c0_35 = arith.constant 0 : index
    %73 = vector.load %arg13[%c16_34, %c0_35] : memref<64x128xbf16, #tpu.memory_space<vmem>>, vector<8x128xbf16>
    tpu.vector_store %arg13[%c16_34, %c0_35], %72 {strides = array<i32>} : memref<64x128xbf16, #tpu.memory_space<vmem>>, vector<8x128xbf16>,
    %c24 = arith.constant 24 : index
    %c0_36 = arith.constant 0 : index
    %74 = vector.load %arg12[%c24, %c0_36] : memref<64x128xf32, #tpu.memory_space<vmem>>, vector<8x128xf32>
    %75 = arith.truncf %71 : vector<8x128xf32> to vector<8x128xbf16>
    %c0_37 = arith.constant 0 : index
    %c0_38 = arith.constant 0 : index
    %76 = vector.load %arg2[%c0_37, %c0_38] : memref<128x128xbf16, #tpu.memory_space<vmem>>, vector<128x128xbf16>
    %cst_39 = arith.constant dense<0.000000e+00> : vector<8x128xf32>
    %77 = tpu.matmul %75, %76, %cst_39 {dimension_numbers = #tpu.dot_dimension_numbers<[1], [0], [0], [1], [0, 0, 1, 1], [], []>} : vector<8x128xbf16>, vector<128x128xbf16>, vector<8x128xf32> -> vector<8x128xf32>
    %78 = arith.addf %74, %77 : vector<8x128xf32>
    %79 = arith.negf %78 : vector<8x128xf32>
    %80 = math.exp %79 : vector<8x128xf32>
    %cst_40 = arith.constant 1.000000e+00 : f32
    %81 = vector.broadcast %cst_40 : f32 to vector<8x128xf32>
    %82 = arith.addf %81, %80 : vector<8x128xf32>
    %83 = arith.divf %81, %82 : vector<8x128xf32>
    %c64_i32_41 = arith.constant 64 : i32
    %84 = tpu.dynamic_rotate %83 by %c64_i32_41 dim 1 : vector<8x128xf32>, i32 -> vector<8x128xf32>
    %c32_i32_42 = arith.constant 32 : i32
    %85 = tpu.dynamic_rotate %83 by %c32_i32_42 dim 1 : vector<8x128xf32>, i32 -> vector<8x128xf32>
    %86 = arith.addf %77, %9 : vector<8x128xf32>
    %87 = arith.mulf %84, %86 : vector<8x128xf32>
    %88 = arith.addf %74, %87 : vector<8x128xf32>
    %89 = math.tanh %88 : vector<8x128xf32>
    %90 = arith.subf %71, %89 : vector<8x128xf32>
    %91 = arith.mulf %85, %90 : vector<8x128xf32>
    %92 = arith.addf %89, %91 : vector<8x128xf32>
    %93 = arith.truncf %92 : vector<8x128xf32> to vector<8x128xbf16>
    %c24_43 = arith.constant 24 : index
    %c0_44 = arith.constant 0 : index
    %94 = vector.load %arg13[%c24_43, %c0_44] : memref<64x128xbf16, #tpu.memory_space<vmem>>, vector<8x128xbf16>
    tpu.vector_store %arg13[%c24_43, %c0_44], %93 {strides = array<i32>} : memref<64x128xbf16, #tpu.memory_space<vmem>>, vector<8x128xbf16>,
    %c32 = arith.constant 32 : index
    %c0_45 = arith.constant 0 : index
    %95 = vector.load %arg12[%c32, %c0_45] : memref<64x128xf32, #tpu.memory_space<vmem>>, vector<8x128xf32>
    %96 = arith.truncf %92 : vector<8x128xf32> to vector<8x128xbf16>
    %c0_46 = arith.constant 0 : index
    %c0_47 = arith.constant 0 : index
    %97 = vector.load %arg2[%c0_46, %c0_47] : memref<128x128xbf16, #tpu.memory_space<vmem>>, vector<128x128xbf16>
    %cst_48 = arith.constant dense<0.000000e+00> : vector<8x128xf32>
    %98 = tpu.matmul %96, %97, %cst_48 {dimension_numbers = #tpu.dot_dimension_numbers<[1], [0], [0], [1], [0, 0, 1, 1], [], []>} : vector<8x128xbf16>, vector<128x128xbf16>, vector<8x128xf32> -> vector<8x128xf32>
    %99 = arith.addf %95, %98 : vector<8x128xf32>
    %100 = arith.negf %99 : vector<8x128xf32>
    %101 = math.exp %100 : vector<8x128xf32>
    %cst_49 = arith.constant 1.000000e+00 : f32
    %102 = vector.broadcast %cst_49 : f32 to vector<8x128xf32>
    %103 = arith.addf %102, %101 : vector<8x128xf32>
    %104 = arith.divf %102, %103 : vector<8x128xf32>
    %c64_i32_50 = arith.constant 64 : i32
    %105 = tpu.dynamic_rotate %104 by %c64_i32_50 dim 1 : vector<8x128xf32>, i32 -> vector<8x128xf32>
    %c32_i32_51 = arith.constant 32 : i32
    %106 = tpu.dynamic_rotate %104 by %c32_i32_51 dim 1 : vector<8x128xf32>, i32 -> vector<8x128xf32>
    %107 = arith.addf %98, %9 : vector<8x128xf32>
    %108 = arith.mulf %105, %107 : vector<8x128xf32>
    %109 = arith.addf %95, %108 : vector<8x128xf32>
    %110 = math.tanh %109 : vector<8x128xf32>
    %111 = arith.subf %92, %110 : vector<8x128xf32>
    %112 = arith.mulf %106, %111 : vector<8x128xf32>
    %113 = arith.addf %110, %112 : vector<8x128xf32>
    %114 = arith.truncf %113 : vector<8x128xf32> to vector<8x128xbf16>
    %c32_52 = arith.constant 32 : index
    %c0_53 = arith.constant 0 : index
    %115 = vector.load %arg13[%c32_52, %c0_53] : memref<64x128xbf16, #tpu.memory_space<vmem>>, vector<8x128xbf16>
    tpu.vector_store %arg13[%c32_52, %c0_53], %114 {strides = array<i32>} : memref<64x128xbf16, #tpu.memory_space<vmem>>, vector<8x128xbf16>,
    %c40 = arith.constant 40 : index
    %c0_54 = arith.constant 0 : index
    %116 = vector.load %arg12[%c40, %c0_54] : memref<64x128xf32, #tpu.memory_space<vmem>>, vector<8x128xf32>
    %117 = arith.truncf %113 : vector<8x128xf32> to vector<8x128xbf16>
    %c0_55 = arith.constant 0 : index
    %c0_56 = arith.constant 0 : index
    %118 = vector.load %arg2[%c0_55, %c0_56] : memref<128x128xbf16, #tpu.memory_space<vmem>>, vector<128x128xbf16>
    %cst_57 = arith.constant dense<0.000000e+00> : vector<8x128xf32>
    %119 = tpu.matmul %117, %118, %cst_57 {dimension_numbers = #tpu.dot_dimension_numbers<[1], [0], [0], [1], [0, 0, 1, 1], [], []>} : vector<8x128xbf16>, vector<128x128xbf16>, vector<8x128xf32> -> vector<8x128xf32>
    %120 = arith.addf %116, %119 : vector<8x128xf32>
    %121 = arith.negf %120 : vector<8x128xf32>
    %122 = math.exp %121 : vector<8x128xf32>
    %cst_58 = arith.constant 1.000000e+00 : f32
    %123 = vector.broadcast %cst_58 : f32 to vector<8x128xf32>
    %124 = arith.addf %123, %122 : vector<8x128xf32>
    %125 = arith.divf %123, %124 : vector<8x128xf32>
    %c64_i32_59 = arith.constant 64 : i32
    %126 = tpu.dynamic_rotate %125 by %c64_i32_59 dim 1 : vector<8x128xf32>, i32 -> vector<8x128xf32>
    %c32_i32_60 = arith.constant 32 : i32
    %127 = tpu.dynamic_rotate %125 by %c32_i32_60 dim 1 : vector<8x128xf32>, i32 -> vector<8x128xf32>
    %128 = arith.addf %119, %9 : vector<8x128xf32>
    %129 = arith.mulf %126, %128 : vector<8x128xf32>
    %130 = arith.addf %116, %129 : vector<8x128xf32>
    %131 = math.tanh %130 : vector<8x128xf32>
    %132 = arith.subf %113, %131 : vector<8x128xf32>
    %133 = arith.mulf %127, %132 : vector<8x128xf32>
    %134 = arith.addf %131, %133 : vector<8x128xf32>
    %135 = arith.truncf %134 : vector<8x128xf32> to vector<8x128xbf16>
    %c40_61 = arith.constant 40 : index
    %c0_62 = arith.constant 0 : index
    %136 = vector.load %arg13[%c40_61, %c0_62] : memref<64x128xbf16, #tpu.memory_space<vmem>>, vector<8x128xbf16>
    tpu.vector_store %arg13[%c40_61, %c0_62], %135 {strides = array<i32>} : memref<64x128xbf16, #tpu.memory_space<vmem>>, vector<8x128xbf16>,
    %c48 = arith.constant 48 : index
    %c0_63 = arith.constant 0 : index
    %137 = vector.load %arg12[%c48, %c0_63] : memref<64x128xf32, #tpu.memory_space<vmem>>, vector<8x128xf32>
    %138 = arith.truncf %134 : vector<8x128xf32> to vector<8x128xbf16>
    %c0_64 = arith.constant 0 : index
    %c0_65 = arith.constant 0 : index
    %139 = vector.load %arg2[%c0_64, %c0_65] : memref<128x128xbf16, #tpu.memory_space<vmem>>, vector<128x128xbf16>
    %cst_66 = arith.constant dense<0.000000e+00> : vector<8x128xf32>
    %140 = tpu.matmul %138, %139, %cst_66 {dimension_numbers = #tpu.dot_dimension_numbers<[1], [0], [0], [1], [0, 0, 1, 1], [], []>} : vector<8x128xbf16>, vector<128x128xbf16>, vector<8x128xf32> -> vector<8x128xf32>
    %141 = arith.addf %137, %140 : vector<8x128xf32>
    %142 = arith.negf %141 : vector<8x128xf32>
    %143 = math.exp %142 : vector<8x128xf32>
    %cst_67 = arith.constant 1.000000e+00 : f32
    %144 = vector.broadcast %cst_67 : f32 to vector<8x128xf32>
    %145 = arith.addf %144, %143 : vector<8x128xf32>
    %146 = arith.divf %144, %145 : vector<8x128xf32>
    %c64_i32_68 = arith.constant 64 : i32
    %147 = tpu.dynamic_rotate %146 by %c64_i32_68 dim 1 : vector<8x128xf32>, i32 -> vector<8x128xf32>
    %c32_i32_69 = arith.constant 32 : i32
    %148 = tpu.dynamic_rotate %146 by %c32_i32_69 dim 1 : vector<8x128xf32>, i32 -> vector<8x128xf32>
    %149 = arith.addf %140, %9 : vector<8x128xf32>
    %150 = arith.mulf %147, %149 : vector<8x128xf32>
    %151 = arith.addf %137, %150 : vector<8x128xf32>
    %152 = math.tanh %151 : vector<8x128xf32>
    %153 = arith.subf %134, %152 : vector<8x128xf32>
    %154 = arith.mulf %148, %153 : vector<8x128xf32>
    %155 = arith.addf %152, %154 : vector<8x128xf32>
    %156 = arith.truncf %155 : vector<8x128xf32> to vector<8x128xbf16>
    %c48_70 = arith.constant 48 : index
    %c0_71 = arith.constant 0 : index
    %157 = vector.load %arg13[%c48_70, %c0_71] : memref<64x128xbf16, #tpu.memory_space<vmem>>, vector<8x128xbf16>
    tpu.vector_store %arg13[%c48_70, %c0_71], %156 {strides = array<i32>} : memref<64x128xbf16, #tpu.memory_space<vmem>>, vector<8x128xbf16>,
    %c56 = arith.constant 56 : index
    %c0_72 = arith.constant 0 : index
    %158 = vector.load %arg12[%c56, %c0_72] : memref<64x128xf32, #tpu.memory_space<vmem>>, vector<8x128xf32>
    %159 = arith.truncf %155 : vector<8x128xf32> to vector<8x128xbf16>
    %c0_73 = arith.constant 0 : index
    %c0_74 = arith.constant 0 : index
    %160 = vector.load %arg2[%c0_73, %c0_74] : memref<128x128xbf16, #tpu.memory_space<vmem>>, vector<128x128xbf16>
    %cst_75 = arith.constant dense<0.000000e+00> : vector<8x128xf32>
    %161 = tpu.matmul %159, %160, %cst_75 {dimension_numbers = #tpu.dot_dimension_numbers<[1], [0], [0], [1], [0, 0, 1, 1], [], []>} : vector<8x128xbf16>, vector<128x128xbf16>, vector<8x128xf32> -> vector<8x128xf32>
    %162 = arith.addf %158, %161 : vector<8x128xf32>
    %163 = arith.negf %162 : vector<8x128xf32>
    %164 = math.exp %163 : vector<8x128xf32>
    %cst_76 = arith.constant 1.000000e+00 : f32
    %165 = vector.broadcast %cst_76 : f32 to vector<8x128xf32>
    %166 = arith.addf %165, %164 : vector<8x128xf32>
    %167 = arith.divf %165, %166 : vector<8x128xf32>
    %c64_i32_77 = arith.constant 64 : i32
    %168 = tpu.dynamic_rotate %167 by %c64_i32_77 dim 1 : vector<8x128xf32>, i32 -> vector<8x128xf32>
    %c32_i32_78 = arith.constant 32 : i32
    %169 = tpu.dynamic_rotate %167 by %c32_i32_78 dim 1 : vector<8x128xf32>, i32 -> vector<8x128xf32>
    %170 = arith.addf %161, %9 : vector<8x128xf32>
    %171 = arith.mulf %168, %170 : vector<8x128xf32>
    %172 = arith.addf %158, %171 : vector<8x128xf32>
    %173 = math.tanh %172 : vector<8x128xf32>
    %174 = arith.subf %155, %173 : vector<8x128xf32>
    %175 = arith.mulf %169, %174 : vector<8x128xf32>
    %176 = arith.addf %173, %175 : vector<8x128xf32>
    %177 = arith.truncf %176 : vector<8x128xf32> to vector<8x128xbf16>
    %c56_79 = arith.constant 56 : index
    %c0_80 = arith.constant 0 : index
    %178 = vector.load %arg13[%c56_79, %c0_80] : memref<64x128xbf16, #tpu.memory_space<vmem>>, vector<8x128xbf16>
    tpu.vector_store %arg13[%c56_79, %c0_80], %177 {strides = array<i32>} : memref<64x128xbf16, #tpu.memory_space<vmem>>, vector<8x128xbf16>,
    %c0_81 = arith.constant 0 : index
    %c0_82 = arith.constant 0 : index
    %179 = vector.load %arg7[%c0_81, %c0_82] : memref<1x128xf32, #tpu.memory_space<vmem>>, vector<1x128xf32>
    %c0_83 = arith.constant 0 : index
    %c0_84 = arith.constant 0 : index
    %180 = vector.load %arg8[%c0_83, %c0_84] : memref<1x128xf32, #tpu.memory_space<vmem>>, vector<1x128xf32>
    %c0_85 = arith.constant 0 : index
    %c0_86 = arith.constant 0 : index
    %181 = vector.load %arg13[%c0_85, %c0_86] : memref<64x128xbf16, #tpu.memory_space<vmem>>, vector<64x128xbf16>
    %c0_87 = arith.constant 0 : index
    %c0_88 = arith.constant 0 : index
    %182 = vector.load %arg5[%c0_87, %c0_88] : memref<128x128xbf16, #tpu.memory_space<vmem>>, vector<128x128xbf16>
    %cst_89 = arith.constant dense<0.000000e+00> : vector<64x128xf32>
    %183 = tpu.matmul %181, %182, %cst_89 {dimension_numbers = #tpu.dot_dimension_numbers<[1], [0], [0], [1], [0, 0, 1, 1], [], []>} : vector<64x128xbf16>, vector<128x128xbf16>, vector<64x128xf32> -> vector<64x128xf32>
    %184 = vector.broadcast %179 : vector<1x128xf32> to vector<64x128xf32>
    %185 = arith.addf %183, %184 : vector<64x128xf32>
    %c0_90 = arith.constant 0 : index
    %c0_91 = arith.constant 0 : index
    %186 = vector.load %arg12[%c0_90, %c0_91] : memref<64x128xf32, #tpu.memory_space<vmem>>, vector<64x128xf32>
    tpu.vector_store %arg12[%c0_90, %c0_91], %185 {strides = array<i32>} : memref<64x128xf32, #tpu.memory_space<vmem>>, vector<64x128xf32>,
    %187 = vector.shape_cast %180 : vector<1x128xf32> to vector<1x128xf32>
    %188 = vector.broadcast %187 : vector<1x128xf32> to vector<8x128xf32>
    %cst_92 = arith.constant 0.000000e+00 : f32
    %189 = vector.broadcast %cst_92 : f32 to vector<8x128xf32>
    %c0_93 = arith.constant 0 : index
    %c0_94 = arith.constant 0 : index
    %190 = vector.load %arg12[%c0_93, %c0_94] : memref<64x128xf32, #tpu.memory_space<vmem>>, vector<8x128xf32>
    %191 = arith.truncf %189 : vector<8x128xf32> to vector<8x128xbf16>
    %c0_95 = arith.constant 0 : index
    %c0_96 = arith.constant 0 : index
    %192 = vector.load %arg6[%c0_95, %c0_96] : memref<128x128xbf16, #tpu.memory_space<vmem>>, vector<128x128xbf16>
    %cst_97 = arith.constant dense<0.000000e+00> : vector<8x128xf32>
    %193 = tpu.matmul %191, %192, %cst_97 {dimension_numbers = #tpu.dot_dimension_numbers<[1], [0], [0], [1], [0, 0, 1, 1], [], []>} : vector<8x128xbf16>, vector<128x128xbf16>, vector<8x128xf32> -> vector<8x128xf32>
    %194 = arith.addf %190, %193 : vector<8x128xf32>
    %195 = arith.negf %194 : vector<8x128xf32>
    %196 = math.exp %195 : vector<8x128xf32>
    %cst_98 = arith.constant 1.000000e+00 : f32
    %197 = vector.broadcast %cst_98 : f32 to vector<8x128xf32>
    %198 = arith.addf %197, %196 : vector<8x128xf32>
    %199 = arith.divf %197, %198 : vector<8x128xf32>
    %c64_i32_99 = arith.constant 64 : i32
    %200 = tpu.dynamic_rotate %199 by %c64_i32_99 dim 1 : vector<8x128xf32>, i32 -> vector<8x128xf32>
    %c32_i32_100 = arith.constant 32 : i32
    %201 = tpu.dynamic_rotate %199 by %c32_i32_100 dim 1 : vector<8x128xf32>, i32 -> vector<8x128xf32>
    %202 = arith.addf %193, %188 : vector<8x128xf32>
    %203 = arith.mulf %200, %202 : vector<8x128xf32>
    %204 = arith.addf %190, %203 : vector<8x128xf32>
    %205 = math.tanh %204 : vector<8x128xf32>
    %206 = arith.subf %189, %205 : vector<8x128xf32>
    %207 = arith.mulf %201, %206 : vector<8x128xf32>
    %208 = arith.addf %205, %207 : vector<8x128xf32>
    %c8_101 = arith.constant 8 : index
    %c0_102 = arith.constant 0 : index
    %209 = vector.load %arg12[%c8_101, %c0_102] : memref<64x128xf32, #tpu.memory_space<vmem>>, vector<8x128xf32>
    %210 = arith.truncf %208 : vector<8x128xf32> to vector<8x128xbf16>
    %c0_103 = arith.constant 0 : index
    %c0_104 = arith.constant 0 : index
    %211 = vector.load %arg6[%c0_103, %c0_104] : memref<128x128xbf16, #tpu.memory_space<vmem>>, vector<128x128xbf16>
    %cst_105 = arith.constant dense<0.000000e+00> : vector<8x128xf32>
    %212 = tpu.matmul %210, %211, %cst_105 {dimension_numbers = #tpu.dot_dimension_numbers<[1], [0], [0], [1], [0, 0, 1, 1], [], []>} : vector<8x128xbf16>, vector<128x128xbf16>, vector<8x128xf32> -> vector<8x128xf32>
    %213 = arith.addf %209, %212 : vector<8x128xf32>
    %214 = arith.negf %213 : vector<8x128xf32>
    %215 = math.exp %214 : vector<8x128xf32>
    %cst_106 = arith.constant 1.000000e+00 : f32
    %216 = vector.broadcast %cst_106 : f32 to vector<8x128xf32>
    %217 = arith.addf %216, %215 : vector<8x128xf32>
    %218 = arith.divf %216, %217 : vector<8x128xf32>
    %c64_i32_107 = arith.constant 64 : i32
    %219 = tpu.dynamic_rotate %218 by %c64_i32_107 dim 1 : vector<8x128xf32>, i32 -> vector<8x128xf32>
    %c32_i32_108 = arith.constant 32 : i32
    %220 = tpu.dynamic_rotate %218 by %c32_i32_108 dim 1 : vector<8x128xf32>, i32 -> vector<8x128xf32>
    %221 = arith.addf %212, %188 : vector<8x128xf32>
    %222 = arith.mulf %219, %221 : vector<8x128xf32>
    %223 = arith.addf %209, %222 : vector<8x128xf32>
    %224 = math.tanh %223 : vector<8x128xf32>
    %225 = arith.subf %208, %224 : vector<8x128xf32>
    %226 = arith.mulf %220, %225 : vector<8x128xf32>
    %227 = arith.addf %224, %226 : vector<8x128xf32>
    %c16_109 = arith.constant 16 : index
    %c0_110 = arith.constant 0 : index
    %228 = vector.load %arg12[%c16_109, %c0_110] : memref<64x128xf32, #tpu.memory_space<vmem>>, vector<8x128xf32>
    %229 = arith.truncf %227 : vector<8x128xf32> to vector<8x128xbf16>
    %c0_111 = arith.constant 0 : index
    %c0_112 = arith.constant 0 : index
    %230 = vector.load %arg6[%c0_111, %c0_112] : memref<128x128xbf16, #tpu.memory_space<vmem>>, vector<128x128xbf16>
    %cst_113 = arith.constant dense<0.000000e+00> : vector<8x128xf32>
    %231 = tpu.matmul %229, %230, %cst_113 {dimension_numbers = #tpu.dot_dimension_numbers<[1], [0], [0], [1], [0, 0, 1, 1], [], []>} : vector<8x128xbf16>, vector<128x128xbf16>, vector<8x128xf32> -> vector<8x128xf32>
    %232 = arith.addf %228, %231 : vector<8x128xf32>
    %233 = arith.negf %232 : vector<8x128xf32>
    %234 = math.exp %233 : vector<8x128xf32>
    %cst_114 = arith.constant 1.000000e+00 : f32
    %235 = vector.broadcast %cst_114 : f32 to vector<8x128xf32>
    %236 = arith.addf %235, %234 : vector<8x128xf32>
    %237 = arith.divf %235, %236 : vector<8x128xf32>
    %c64_i32_115 = arith.constant 64 : i32
    %238 = tpu.dynamic_rotate %237 by %c64_i32_115 dim 1 : vector<8x128xf32>, i32 -> vector<8x128xf32>
    %c32_i32_116 = arith.constant 32 : i32
    %239 = tpu.dynamic_rotate %237 by %c32_i32_116 dim 1 : vector<8x128xf32>, i32 -> vector<8x128xf32>
    %240 = arith.addf %231, %188 : vector<8x128xf32>
    %241 = arith.mulf %238, %240 : vector<8x128xf32>
    %242 = arith.addf %228, %241 : vector<8x128xf32>
    %243 = math.tanh %242 : vector<8x128xf32>
    %244 = arith.subf %227, %243 : vector<8x128xf32>
    %245 = arith.mulf %239, %244 : vector<8x128xf32>
    %246 = arith.addf %243, %245 : vector<8x128xf32>
    %c24_117 = arith.constant 24 : index
    %c0_118 = arith.constant 0 : index
    %247 = vector.load %arg12[%c24_117, %c0_118] : memref<64x128xf32, #tpu.memory_space<vmem>>, vector<8x128xf32>
    %248 = arith.truncf %246 : vector<8x128xf32> to vector<8x128xbf16>
    %c0_119 = arith.constant 0 : index
    %c0_120 = arith.constant 0 : index
    %249 = vector.load %arg6[%c0_119, %c0_120] : memref<128x128xbf16, #tpu.memory_space<vmem>>, vector<128x128xbf16>
    %cst_121 = arith.constant dense<0.000000e+00> : vector<8x128xf32>
    %250 = tpu.matmul %248, %249, %cst_121 {dimension_numbers = #tpu.dot_dimension_numbers<[1], [0], [0], [1], [0, 0, 1, 1], [], []>} : vector<8x128xbf16>, vector<128x128xbf16>, vector<8x128xf32> -> vector<8x128xf32>
    %251 = arith.addf %247, %250 : vector<8x128xf32>
    %252 = arith.negf %251 : vector<8x128xf32>
    %253 = math.exp %252 : vector<8x128xf32>
    %cst_122 = arith.constant 1.000000e+00 : f32
    %254 = vector.broadcast %cst_122 : f32 to vector<8x128xf32>
    %255 = arith.addf %254, %253 : vector<8x128xf32>
    %256 = arith.divf %254, %255 : vector<8x128xf32>
    %c64_i32_123 = arith.constant 64 : i32
    %257 = tpu.dynamic_rotate %256 by %c64_i32_123 dim 1 : vector<8x128xf32>, i32 -> vector<8x128xf32>
    %c32_i32_124 = arith.constant 32 : i32
    %258 = tpu.dynamic_rotate %256 by %c32_i32_124 dim 1 : vector<8x128xf32>, i32 -> vector<8x128xf32>
    %259 = arith.addf %250, %188 : vector<8x128xf32>
    %260 = arith.mulf %257, %259 : vector<8x128xf32>
    %261 = arith.addf %247, %260 : vector<8x128xf32>
    %262 = math.tanh %261 : vector<8x128xf32>
    %263 = arith.subf %246, %262 : vector<8x128xf32>
    %264 = arith.mulf %258, %263 : vector<8x128xf32>
    %265 = arith.addf %262, %264 : vector<8x128xf32>
    %c32_125 = arith.constant 32 : index
    %c0_126 = arith.constant 0 : index
    %266 = vector.load %arg12[%c32_125, %c0_126] : memref<64x128xf32, #tpu.memory_space<vmem>>, vector<8x128xf32>
    %267 = arith.truncf %265 : vector<8x128xf32> to vector<8x128xbf16>
    %c0_127 = arith.constant 0 : index
    %c0_128 = arith.constant 0 : index
    %268 = vector.load %arg6[%c0_127, %c0_128] : memref<128x128xbf16, #tpu.memory_space<vmem>>, vector<128x128xbf16>
    %cst_129 = arith.constant dense<0.000000e+00> : vector<8x128xf32>
    %269 = tpu.matmul %267, %268, %cst_129 {dimension_numbers = #tpu.dot_dimension_numbers<[1], [0], [0], [1], [0, 0, 1, 1], [], []>} : vector<8x128xbf16>, vector<128x128xbf16>, vector<8x128xf32> -> vector<8x128xf32>
    %270 = arith.addf %266, %269 : vector<8x128xf32>
    %271 = arith.negf %270 : vector<8x128xf32>
    %272 = math.exp %271 : vector<8x128xf32>
    %cst_130 = arith.constant 1.000000e+00 : f32
    %273 = vector.broadcast %cst_130 : f32 to vector<8x128xf32>
    %274 = arith.addf %273, %272 : vector<8x128xf32>
    %275 = arith.divf %273, %274 : vector<8x128xf32>
    %c64_i32_131 = arith.constant 64 : i32
    %276 = tpu.dynamic_rotate %275 by %c64_i32_131 dim 1 : vector<8x128xf32>, i32 -> vector<8x128xf32>
    %c32_i32_132 = arith.constant 32 : i32
    %277 = tpu.dynamic_rotate %275 by %c32_i32_132 dim 1 : vector<8x128xf32>, i32 -> vector<8x128xf32>
    %278 = arith.addf %269, %188 : vector<8x128xf32>
    %279 = arith.mulf %276, %278 : vector<8x128xf32>
    %280 = arith.addf %266, %279 : vector<8x128xf32>
    %281 = math.tanh %280 : vector<8x128xf32>
    %282 = arith.subf %265, %281 : vector<8x128xf32>
    %283 = arith.mulf %277, %282 : vector<8x128xf32>
    %284 = arith.addf %281, %283 : vector<8x128xf32>
    %c40_133 = arith.constant 40 : index
    %c0_134 = arith.constant 0 : index
    %285 = vector.load %arg12[%c40_133, %c0_134] : memref<64x128xf32, #tpu.memory_space<vmem>>, vector<8x128xf32>
    %286 = arith.truncf %284 : vector<8x128xf32> to vector<8x128xbf16>
    %c0_135 = arith.constant 0 : index
    %c0_136 = arith.constant 0 : index
    %287 = vector.load %arg6[%c0_135, %c0_136] : memref<128x128xbf16, #tpu.memory_space<vmem>>, vector<128x128xbf16>
    %cst_137 = arith.constant dense<0.000000e+00> : vector<8x128xf32>
    %288 = tpu.matmul %286, %287, %cst_137 {dimension_numbers = #tpu.dot_dimension_numbers<[1], [0], [0], [1], [0, 0, 1, 1], [], []>} : vector<8x128xbf16>, vector<128x128xbf16>, vector<8x128xf32> -> vector<8x128xf32>
    %289 = arith.addf %285, %288 : vector<8x128xf32>
    %290 = arith.negf %289 : vector<8x128xf32>
    %291 = math.exp %290 : vector<8x128xf32>
    %cst_138 = arith.constant 1.000000e+00 : f32
    %292 = vector.broadcast %cst_138 : f32 to vector<8x128xf32>
    %293 = arith.addf %292, %291 : vector<8x128xf32>
    %294 = arith.divf %292, %293 : vector<8x128xf32>
    %c64_i32_139 = arith.constant 64 : i32
    %295 = tpu.dynamic_rotate %294 by %c64_i32_139 dim 1 : vector<8x128xf32>, i32 -> vector<8x128xf32>
    %c32_i32_140 = arith.constant 32 : i32
    %296 = tpu.dynamic_rotate %294 by %c32_i32_140 dim 1 : vector<8x128xf32>, i32 -> vector<8x128xf32>
    %297 = arith.addf %288, %188 : vector<8x128xf32>
    %298 = arith.mulf %295, %297 : vector<8x128xf32>
    %299 = arith.addf %285, %298 : vector<8x128xf32>
    %300 = math.tanh %299 : vector<8x128xf32>
    %301 = arith.subf %284, %300 : vector<8x128xf32>
    %302 = arith.mulf %296, %301 : vector<8x128xf32>
    %303 = arith.addf %300, %302 : vector<8x128xf32>
    %c48_141 = arith.constant 48 : index
    %c0_142 = arith.constant 0 : index
    %304 = vector.load %arg12[%c48_141, %c0_142] : memref<64x128xf32, #tpu.memory_space<vmem>>, vector<8x128xf32>
    %305 = arith.truncf %303 : vector<8x128xf32> to vector<8x128xbf16>
    %c0_143 = arith.constant 0 : index
    %c0_144 = arith.constant 0 : index
    %306 = vector.load %arg6[%c0_143, %c0_144] : memref<128x128xbf16, #tpu.memory_space<vmem>>, vector<128x128xbf16>
    %cst_145 = arith.constant dense<0.000000e+00> : vector<8x128xf32>
    %307 = tpu.matmul %305, %306, %cst_145 {dimension_numbers = #tpu.dot_dimension_numbers<[1], [0], [0], [1], [0, 0, 1, 1], [], []>} : vector<8x128xbf16>, vector<128x128xbf16>, vector<8x128xf32> -> vector<8x128xf32>
    %308 = arith.addf %304, %307 : vector<8x128xf32>
    %309 = arith.negf %308 : vector<8x128xf32>
    %310 = math.exp %309 : vector<8x128xf32>
    %cst_146 = arith.constant 1.000000e+00 : f32
    %311 = vector.broadcast %cst_146 : f32 to vector<8x128xf32>
    %312 = arith.addf %311, %310 : vector<8x128xf32>
    %313 = arith.divf %311, %312 : vector<8x128xf32>
    %c64_i32_147 = arith.constant 64 : i32
    %314 = tpu.dynamic_rotate %313 by %c64_i32_147 dim 1 : vector<8x128xf32>, i32 -> vector<8x128xf32>
    %c32_i32_148 = arith.constant 32 : i32
    %315 = tpu.dynamic_rotate %313 by %c32_i32_148 dim 1 : vector<8x128xf32>, i32 -> vector<8x128xf32>
    %316 = arith.addf %307, %188 : vector<8x128xf32>
    %317 = arith.mulf %314, %316 : vector<8x128xf32>
    %318 = arith.addf %304, %317 : vector<8x128xf32>
    %319 = math.tanh %318 : vector<8x128xf32>
    %320 = arith.subf %303, %319 : vector<8x128xf32>
    %321 = arith.mulf %315, %320 : vector<8x128xf32>
    %322 = arith.addf %319, %321 : vector<8x128xf32>
    %c56_149 = arith.constant 56 : index
    %c0_150 = arith.constant 0 : index
    %323 = vector.load %arg12[%c56_149, %c0_150] : memref<64x128xf32, #tpu.memory_space<vmem>>, vector<8x128xf32>
    %324 = arith.truncf %322 : vector<8x128xf32> to vector<8x128xbf16>
    %c0_151 = arith.constant 0 : index
    %c0_152 = arith.constant 0 : index
    %325 = vector.load %arg6[%c0_151, %c0_152] : memref<128x128xbf16, #tpu.memory_space<vmem>>, vector<128x128xbf16>
    %cst_153 = arith.constant dense<0.000000e+00> : vector<8x128xf32>
    %326 = tpu.matmul %324, %325, %cst_153 {dimension_numbers = #tpu.dot_dimension_numbers<[1], [0], [0], [1], [0, 0, 1, 1], [], []>} : vector<8x128xbf16>, vector<128x128xbf16>, vector<8x128xf32> -> vector<8x128xf32>
    %327 = arith.addf %323, %326 : vector<8x128xf32>
    %328 = arith.negf %327 : vector<8x128xf32>
    %329 = math.exp %328 : vector<8x128xf32>
    %cst_154 = arith.constant 1.000000e+00 : f32
    %330 = vector.broadcast %cst_154 : f32 to vector<8x128xf32>
    %331 = arith.addf %330, %329 : vector<8x128xf32>
    %332 = arith.divf %330, %331 : vector<8x128xf32>
    %c64_i32_155 = arith.constant 64 : i32
    %333 = tpu.dynamic_rotate %332 by %c64_i32_155 dim 1 : vector<8x128xf32>, i32 -> vector<8x128xf32>
    %c32_i32_156 = arith.constant 32 : i32
    %334 = tpu.dynamic_rotate %332 by %c32_i32_156 dim 1 : vector<8x128xf32>, i32 -> vector<8x128xf32>
    %335 = arith.addf %326, %188 : vector<8x128xf32>
    %336 = arith.mulf %333, %335 : vector<8x128xf32>
    %337 = arith.addf %323, %336 : vector<8x128xf32>
    %338 = math.tanh %337 : vector<8x128xf32>
    %339 = arith.subf %322, %338 : vector<8x128xf32>
    %340 = arith.mulf %334, %339 : vector<8x128xf32>
    %341 = arith.addf %338, %340 : vector<8x128xf32>
    %342 = arith.truncf %341 : vector<8x128xf32> to vector<8x128xbf16>
    %c0_157 = arith.constant 0 : index
    %c0_158 = arith.constant 0 : index
    %343 = vector.load %arg9[%c0_157, %c0_158] : memref<128x128xbf16, #tpu.memory_space<vmem>>, vector<128x128xbf16>
    %cst_159 = arith.constant dense<0.000000e+00> : vector<8x128xf32>
    %344 = tpu.matmul %342, %343, %cst_159 {dimension_numbers = #tpu.dot_dimension_numbers<[1], [0], [0], [1], [0, 0, 1, 1], [], []>} : vector<8x128xbf16>, vector<128x128xbf16>, vector<8x128xf32> -> vector<8x128xf32>
    %c0_160 = arith.constant 0 : index
    %c0_161 = arith.constant 0 : index
    %345 = vector.load %arg10[%c0_160, %c0_161] : memref<1x128xf32, #tpu.memory_space<vmem>>, vector<1x128xf32>
    %346 = vector.broadcast %345 : vector<1x128xf32> to vector<8x128xf32>
    %347 = arith.addf %344, %346 : vector<8x128xf32>
    %c0_162 = arith.constant 0 : index
    %c0_163 = arith.constant 0 : index
    %348 = vector.load %arg11[%c0_162, %c0_163] : memref<8x128xf32, #tpu.memory_space<vmem>>, vector<8x128xf32>
    tpu.vector_store %arg11[%c0_162, %c0_163], %347 {strides = array<i32>} : memref<8x128xf32, #tpu.memory_space<vmem>>, vector<8x128xf32>,
    return
  }
}

</mosaic_0001>

<llo_original>
// kernel: gru_model_forward.1
$region0: #{gru_model_forward.1}
  #allocation0 [shape = 'u32[]', space=smem, size = 0x4, offset = 0x4, fixed_abs, tag = 'smem constant byte address 0x4 - core index']
  #allocation1 [shape = 'u32[144,128]{1,0:T(1,128)}', space=vmem, size = 0x12000, scoped, tag = 'internal scratch']
  #allocation2 [shape = 'f32[64,128]{1,0:T(8,128)}', space=vmem, size = 0x8000, scoped, tag = 'scratch operand']
  #allocation3 [shape = 'bf16[64,128]{1,0:T(16,128)(2,1)}', space=vmem, size = 0x4000, scoped, tag = 'scratch operand']
  %s0 = inlined_call_operand.vmem [shape: bf16[64,128], index: 0, kind: input, shape index: {}]
  %s1 = inlined_call_operand.vmem [shape: bf16[128,128], index: 1, kind: input, shape index: {}]
  %s2 = inlined_call_operand.vmem [shape: bf16[128,128], index: 2, kind: input, shape index: {}]
  %s3 = inlined_call_operand.vmem [shape: f32[1,128], index: 3, kind: input, shape index: {}]
  %s4 = inlined_call_operand.vmem [shape: f32[1,128], index: 4, kind: input, shape index: {}]
  %s5 = inlined_call_operand.vmem [shape: bf16[128,128], index: 5, kind: input, shape index: {}]
  %s6 = inlined_call_operand.vmem [shape: bf16[128,128], index: 6, kind: input, shape index: {}]
  %s7 = inlined_call_operand.vmem [shape: f32[1,128], index: 7, kind: input, shape index: {}]
  %s8 = inlined_call_operand.vmem [shape: f32[1,128], index: 8, kind: input, shape index: {}]
  %s9 = inlined_call_operand.vmem [shape: bf16[128,128], index: 9, kind: input, shape index: {}]
  %s10 = inlined_call_operand.vmem [shape: f32[1,128], index: 10, kind: input, shape index: {}]
  %s11 = inlined_call_operand.vmem [shape: f32[8,128], index: 11, kind: output, shape index: {}]
  %s12 = sld [smem:[#allocation0]]
  $region54: #{gru_model_forward.1} parent=0
    _
  %s14 = ssub.s32 1, %s12
  %s15 = scalar_select 0, %s14, %s12
  // Predicated region
  $region2: #{gru_model_forward.1} parent=0 // pred_check
    _
  $region3: #{gru_model_forward.1} parent=0 // pred_check_branch
    %17 = sbr.rel (0) target = $region5
  $region4: #{gru_model_forward.1} parent=0 // pred_region
    _
  $region5: #{gru_model_forward.1} parent=0 // pred_fallthru
    _
  // Predicated region
  $region6: #{gru_model_forward.1} parent=0 // pred_check
    _
  $region7: #{gru_model_forward.1} parent=0 // pred_check_branch
    %19 = sbr.rel (0) target = $region9
  $region8: #{gru_model_forward.1} parent=0 // pred_region
    _
  $region9: #{gru_model_forward.1} parent=0 // pred_fallthru
    _
  // Predicated region
  $region10: #{gru_model_forward.1} parent=0 // pred_check
    _
  $region11: #{gru_model_forward.1} parent=0 // pred_check_branch
    %21 = sbr.rel (0) target = $region13
  $region12: #{gru_model_forward.1} parent=0 // pred_region
    _
  $region13: #{gru_model_forward.1} parent=0 // pred_fallthru
    _
  // Predicated region
  $region14: #{gru_model_forward.1} parent=0 // pred_check
    _
  $region15: #{gru_model_forward.1} parent=0 // pred_check_branch
    %23 = sbr.rel (0) target = $region17
  $region16: #{gru_model_forward.1} parent=0 // pred_region
    _
  $region17: #{gru_model_forward.1} parent=0 // pred_fallthru
    _
  // Predicated region
  $region18: #{gru_model_forward.1} parent=0 // pred_check
    _
  $region19: #{gru_model_forward.1} parent=0 // pred_check_branch
    %25 = sbr.rel (0) target = $region21
  $region20: #{gru_model_forward.1} parent=0 // pred_region
    _
  $region21: #{gru_model_forward.1} parent=0 // pred_fallthru
    _
  // Predicated region
  $region22: #{gru_model_forward.1} parent=0 // pred_check
    _
  $region23: #{gru_model_forward.1} parent=0 // pred_check_branch
    %27 = sbr.rel (0) target = $region25
  $region24: #{gru_model_forward.1} parent=0 // pred_region
    _
  $region25: #{gru_model_forward.1} parent=0 // pred_fallthru
    _
  // Predicated region
  $region26: #{gru_model_forward.1} parent=0 // pred_check
    _
  $region27: #{gru_model_forward.1} parent=0 // pred_check_branch
    %29 = sbr.rel (0) target = $region29
  $region28: #{gru_model_forward.1} parent=0 // pred_region
    _
  $region29: #{gru_model_forward.1} parent=0 // pred_fallthru
    _
  // Predicated region
  $region30: #{gru_model_forward.1} parent=0 // pred_check
    _
  $region31: #{gru_model_forward.1} parent=0 // pred_check_branch
    %31 = sbr.rel (0) target = $region33
  $region32: #{gru_model_forward.1} parent=0 // pred_region
    _
  $region33: #{gru_model_forward.1} parent=0 // pred_fallthru
    _
  // Predicated region
  $region34: #{gru_model_forward.1} parent=0 // pred_check
    _
  $region35: #{gru_model_forward.1} parent=0 // pred_check_branch
    %33 = sbr.rel (0) target = $region37
  $region36: #{gru_model_forward.1} parent=0 // pred_region
    _
  $region37: #{gru_model_forward.1} parent=0 // pred_fallthru
    _
  // Predicated region
  $region38: #{gru_model_forward.1} parent=0 // pred_check
    _
  $region39: #{gru_model_forward.1} parent=0 // pred_check_branch
    %35 = sbr.rel (0) target = $region41
  $region40: #{gru_model_forward.1} parent=0 // pred_region
    _
  $region41: #{gru_model_forward.1} parent=0 // pred_fallthru
    _
  // Predicated region
  $region42: #{gru_model_forward.1} parent=0 // pred_check
    _
  $region43: #{gru_model_forward.1} parent=0 // pred_check_branch
    %37 = sbr.rel (0) target = $region45
  $region44: #{gru_model_forward.1} parent=0 // pred_region
    _
  $region45: #{gru_model_forward.1} parent=0 // pred_fallthru
    _
  %v39 = vld [vmem:[%s3] sm:$0x1]
  %v40 = vld [vmem:[%s4] sm:$0x1]
  %v41 = vld [vmem:[%s0] sm:$0xf]
  %v42 = vld [vmem:[%s0 + $0x4] sm:$0xf]
  %v43 = vld [vmem:[%s0 + $0x8] sm:$0xf]
  %v44 = vld [vmem:[%s0 + $0xc] sm:$0xf]
  %v45 = vld [vmem:[%s0 + $0x10] sm:$0xf]
  %v46 = vld [vmem:[%s0 + $0x14] sm:$0xf]
  %v47 = vld [vmem:[%s0 + $0x18] sm:$0xf]
  %v48 = vld [vmem:[%s0 + $0x1c] sm:$0xf]
  %v49 = vld [vmem:[%s1] sm:$0xf]
  %v50 = vld [vmem:[%s1 + $0x4] sm:$0xf]
  %v51 = vld [vmem:[%s1 + $0x8] sm:$0xf]
  %v52 = vld [vmem:[%s1 + $0xc] sm:$0xf]
  %v53 = vld [vmem:[%s1 + $0x10] sm:$0xf]
  %v54 = vld [vmem:[%s1 + $0x14] sm:$0xf]
  %v55 = vld [vmem:[%s1 + $0x18] sm:$0xf]
  %v56 = vld [vmem:[%s1 + $0x1c] sm:$0xf]
  %v57 = vld [vmem:[%s1 + $0x20] sm:$0xf]
  %v58 = vld [vmem:[%s1 + $0x24] sm:$0xf]
  %v59 = vld [vmem:[%s1 + $0x28] sm:$0xf]
  %v60 = vld [vmem:[%s1 + $0x2c] sm:$0xf]
  %v61 = vld [vmem:[%s1 + $0x30] sm:$0xf]
  %v62 = vld [vmem:[%s1 + $0x34] sm:$0xf]
  %v63 = vld [vmem:[%s1 + $0x38] sm:$0xf]
  %v64 = vld [vmem:[%s1 + $0x3c] sm:$0xf]
  %v66 = vlaneseq
  %v67 = vshrl.u32 %v66, 7
  %v68 = vsub.s32 0, %v67
  %v69 = vrot.slane %v39, %v68
  %v79 = vunpack.c.l.b16 %v41
  %v80 = vunpack.c.l.b16 %v42
  %v81 = vunpack.c.l.b16 %v43
  %v82 = vunpack.c.l.b16 %v44
  %v83 = vunpack.c.l.b16 %v45
  %v84 = vunpack.c.l.b16 %v46
  %v85 = vunpack.c.l.b16 %v47
  %v86 = vunpack.c.l.b16 %v48
  %v87 = vpack.c.b16 %v80, %v79
  %v88 = vpack.c.b16 %v82, %v81
  %v89 = vpack.c.b16 %v84, %v83
  %v90 = vpack.c.b16 %v86, %v85
  %v111 = vunpack.c.l.b16 %v49
  %v112 = vunpack.c.l.b16 %v50
  %v113 = vunpack.c.l.b16 %v51
  %v114 = vunpack.c.l.b16 %v52
  %v115 = vunpack.c.l.b16 %v53
  %v116 = vunpack.c.l.b16 %v54
  %v117 = vunpack.c.l.b16 %v55
  %v118 = vunpack.c.l.b16 %v56
  %v119 = vunpack.c.l.b16 %v57
  %v120 = vunpack.c.l.b16 %v58
  %v121 = vunpack.c.l.b16 %v59
  %v122 = vunpack.c.l.b16 %v60
  %v123 = vunpack.c.l.b16 %v61
  %v124 = vunpack.c.l.b16 %v62
  %v125 = vunpack.c.l.b16 %v63
  %v126 = vunpack.c.l.b16 %v64
  %v127 = vpack.c.b16 %v112, %v111
  %v128 = vpack.c.b16 %v114, %v113
  %v129 = vpack.c.b16 %v116, %v115
  %v130 = vpack.c.b16 %v118, %v117
  %v131 = vpack.c.b16 %v120, %v119
  %v132 = vpack.c.b16 %v122, %v121
  %v133 = vpack.c.b16 %v124, %v123
  %v134 = vpack.c.b16 %v126, %v125
  %143 = vmatprep.subr.bf16.mxu0 0
  %144 = vmatpush1.bf16.msra.mxu0 %v127
  %145 = vmatprep.subr.bf16.mxu0 0
  %146 = vmatpush1.bf16.msra.mxu0 %v128
  %147 = vmatprep.subr.bf16.mxu0 0
  %148 = vmatpush1.bf16.msra.mxu0 %v129
  %149 = vmatprep.subr.bf16.mxu0 0
  %150 = vmatpush1.bf16.msra.mxu0 %v130
  %151 = vmatprep.subr.bf16.mxu0 0
  %152 = vmatpush1.bf16.msra.mxu0 %v131
  %153 = vmatprep.subr.bf16.mxu0 0
  %154 = vmatpush1.bf16.msra.mxu0 %v132
  %155 = vmatprep.subr.bf16.mxu0 0
  %156 = vmatpush1.bf16.msra.mxu0 %v133
  %157 = vmatprep.subr.bf16.mxu0 0
  %158 = vmatpush1.bf16.msra.mxu0 %v134
  %159 = vmatprep.subr.bf16.mxu0 0
  %160 = vmatpush1.bf16.msra.mxu0 0
  %161 = vmatprep.subr.bf16.mxu0 0
  %162 = vmatpush1.bf16.msra.mxu0 0
  %163 = vmatprep.subr.bf16.mxu0 0
  %164 = vmatpush1.bf16.msra.mxu0 0
  %165 = vmatprep.subr.bf16.mxu0 0
  %166 = vmatpush1.bf16.msra.mxu0 0
  %167 = vmatprep.subr.bf16.mxu0 0
  %168 = vmatpush1.bf16.msra.mxu0 0
  %169 = vmatprep.subr.bf16.mxu0 0
  %170 = vmatpush1.bf16.msra.mxu0 0
  %171 = vmatprep.subr.bf16.mxu0 0
  %172 = vmatpush1.bf16.msra.mxu0 0
  %173 = vmatprep.subr.bf16.mxu0 0
  %174 = vmatpush1.bf16.msra.mxu0 0
  %175 = vmatprep.mubr.bf16.mxu0 0
  %176 = vmatmul.mubr.bf16.gmra.mrb[0].mxu0 %v87
  %v177 = vpop.f32.mrb[0].mxu0
  %v178 = vadd.f32 %v69, %v177
  %v179 = vpop.f32.mrb[0].mxu0
  %v180 = vpop.f32.mrb[0].mxu0
  %v181 = vadd.f32 %v69, %v180
  %v182 = vpop.f32.mrb[0].mxu0
  %183 = vmatprep.mubr.bf16.mxu0 0
  %184 = vmatmul.mubr.bf16.gmra.mrb[0].mxu0 %v88
  %v185 = vpop.f32.mrb[0].mxu0
  %v186 = vadd.f32 %v69, %v185
  %v187 = vpop.f32.mrb[0].mxu0
  %v188 = vpop.f32.mrb[0].mxu0
  %v189 = vadd.f32 %v69, %v188
  %v190 = vpop.f32.mrb[0].mxu0
  %191 = vmatprep.mubr.bf16.mxu0 0
  %192 = vmatmul.mubr.bf16.gmra.mrb[0].mxu0 %v89
  %v193 = vpop.f32.mrb[0].mxu0
  %v194 = vadd.f32 %v69, %v193
  %v195 = vpop.f32.mrb[0].mxu0
  %v196 = vpop.f32.mrb[0].mxu0
  %v197 = vadd.f32 %v69, %v196
  %v198 = vpop.f32.mrb[0].mxu0
  %199 = vmatprep.mubr.bf16.mxu0 0
  %200 = vmatmul.mubr.bf16.gmra.mrb[0].mxu0 %v90
  %v201 = vpop.f32.mrb[0].mxu0
  %v202 = vadd.f32 %v69, %v201
  %v203 = vpop.f32.mrb[0].mxu0
  %v204 = vpop.f32.mrb[0].mxu0
  %v205 = vadd.f32 %v69, %v204
  %v206 = vpop.f32.mrb[0].mxu0
  %207 = vdwg.mxu0
  %208 = vst [vmem:[#allocation2] sm:$0xff] %v178
  %209 = vst [vmem:[#allocation2 + $0x8] sm:$0xff] %v181
  %210 = vst [vmem:[#allocation2 + $0x10] sm:$0xff] %v186
  %211 = vst [vmem:[#allocation2 + $0x18] sm:$0xff] %v189
  %212 = vst [vmem:[#allocation2 + $0x20] sm:$0xff] %v194
  %213 = vst [vmem:[#allocation2 + $0x28] sm:$0xff] %v197
  %214 = vst [vmem:[#allocation2 + $0x30] sm:$0xff] %v202
  %215 = vst [vmem:[#allocation2 + $0x38] sm:$0xff] %v205
  %v217 = vlaneseq
  %v218 = vshrl.u32 %v217, 7
  %v219 = vsub.s32 0, %v218
  %v220 = vrot.slane %v40, %v219
  %v222 = vld [vmem:[#allocation2] sm:$0xff]
  %v223 = vld [vmem:[%s2] sm:$0xf]
  %v224 = vld [vmem:[%s2 + $0x4] sm:$0xf]
  %v225 = vld [vmem:[%s2 + $0x8] sm:$0xf]
  %v226 = vld [vmem:[%s2 + $0xc] sm:$0xf]
  %v227 = vld [vmem:[%s2 + $0x10] sm:$0xf]
  %v228 = vld [vmem:[%s2 + $0x14] sm:$0xf]
  %v229 = vld [vmem:[%s2 + $0x18] sm:$0xf]
  %v230 = vld [vmem:[%s2 + $0x1c] sm:$0xf]
  %v231 = vld [vmem:[%s2 + $0x20] sm:$0xf]
  %v232 = vld [vmem:[%s2 + $0x24] sm:$0xf]
  %v233 = vld [vmem:[%s2 + $0x28] sm:$0xf]
  %v234 = vld [vmem:[%s2 + $0x2c] sm:$0xf]
  %v235 = vld [vmem:[%s2 + $0x30] sm:$0xf]
  %v236 = vld [vmem:[%s2 + $0x34] sm:$0xf]
  %v237 = vld [vmem:[%s2 + $0x38] sm:$0xf]
  %v238 = vld [vmem:[%s2 + $0x3c] sm:$0xf]
  %v255 = vunpack.c.l.b16 %v223
  %v256 = vunpack.c.l.b16 %v224
  %v257 = vunpack.c.l.b16 %v225
  %v258 = vunpack.c.l.b16 %v226
  %v259 = vunpack.c.l.b16 %v227
  %v260 = vunpack.c.l.b16 %v228
  %v261 = vunpack.c.l.b16 %v229
  %v262 = vunpack.c.l.b16 %v230
  %v263 = vunpack.c.l.b16 %v231
  %v264 = vunpack.c.l.b16 %v232
  %v265 = vunpack.c.l.b16 %v233
  %v266 = vunpack.c.l.b16 %v234
  %v267 = vunpack.c.l.b16 %v235
  %v268 = vunpack.c.l.b16 %v236
  %v269 = vunpack.c.l.b16 %v237
  %v270 = vunpack.c.l.b16 %v238
  %v271 = vpack.c.b16 %v256, %v255
  %v272 = vpack.c.b16 %v258, %v257
  %v273 = vpack.c.b16 %v260, %v259
  %v274 = vpack.c.b16 %v262, %v261
  %v275 = vpack.c.b16 %v264, %v263
  %v276 = vpack.c.b16 %v266, %v265
  %v277 = vpack.c.b16 %v268, %v267
  %v278 = vpack.c.b16 %v270, %v269
  %287 = vmatprep.subr.bf16.mxu0 0
  %288 = vmatpush1.bf16.msra.mxu0 %v271
  %289 = vmatprep.subr.bf16.mxu0 0
  %290 = vmatpush1.bf16.msra.mxu0 %v272
  %291 = vmatprep.subr.bf16.mxu0 0
  %292 = vmatpush1.bf16.msra.mxu0 %v273
  %293 = vmatprep.subr.bf16.mxu0 0
  %294 = vmatpush1.bf16.msra.mxu0 %v274
  %295 = vmatprep.subr.bf16.mxu0 0
  %296 = vmatpush1.bf16.msra.mxu0 %v275
  %297 = vmatprep.subr.bf16.mxu0 0
  %298 = vmatpush1.bf16.msra.mxu0 %v276
  %299 = vmatprep.subr.bf16.mxu0 0
  %300 = vmatpush1.bf16.msra.mxu0 %v277
  %301 = vmatprep.subr.bf16.mxu0 0
  %302 = vmatpush1.bf16.msra.mxu0 %v278
  %303 = vmatprep.subr.bf16.mxu0 0
  %304 = vmatpush1.bf16.msra.mxu0 0
  %305 = vmatprep.subr.bf16.mxu0 0
  %306 = vmatpush1.bf16.msra.mxu0 0
  %307 = vmatprep.subr.bf16.mxu0 0
  %308 = vmatpush1.bf16.msra.mxu0 0
  %309 = vmatprep.subr.bf16.mxu0 0
  %310 = vmatpush1.bf16.msra.mxu0 0
  %311 = vmatprep.subr.bf16.mxu0 0
  %312 = vmatpush1.bf16.msra.mxu0 0
  %313 = vmatprep.subr.bf16.mxu0 0
  %314 = vmatpush1.bf16.msra.mxu0 0
  %315 = vmatprep.subr.bf16.mxu0 0
  %316 = vmatpush1.bf16.msra.mxu0 0
  %317 = vmatprep.subr.bf16.mxu0 0
  %318 = vmatpush1.bf16.msra.mxu0 0
  %319 = vmatprep.mubr.bf16.mxu0 0
  %320 = vmatmul.mubr.bf16.gmra.mrb[0].mxu0 0
  %v321 = vpop.f32.mrb[0].mxu0
  %v322 = vadd.f32 0.0, %v321
  %v323 = vpop.f32.mrb[0].mxu0
  %v324 = vpop.f32.mrb[0].mxu0
  %v325 = vpop.f32.mrb[0].mxu0
  %326 = vdwg.mxu0
  %v327 = vadd.f32 %v222, %v322
  %v328 = vxor.u32 %v327, 2147483648
  %v329 = vmul.f32 %v328, 1.442695
  %v330 = vpow.pop %v329
  %v331 = vadd.f32 %v330, 1.0
  %v332 = vrcp.pop %v331
  %v333 = vmul.f32 1.0, %v332
  %334 = vrot.lane.b32.xlu0 %v333, 64
  %v335 = vpop.permute.xlu0 %334
  %336 = vrot.lane.b32.xlu0 %v333, 32
  %v337 = vpop.permute.xlu0 %336
  %v338 = vadd.f32 %v322, %v220
  %v339 = vmul.f32 %v335, %v338
  %v340 = vadd.f32 %v222, %v339
  %v341 = vtanh.pop %v340
  %v342 = vsub.f32 0.0, %v341
  %v343 = vmul.f32 %v337, %v342
  %v344 = vadd.f32 %v341, %v343
  %v345 = vpack.c.bf16 %v344, %v344
  %346 = vst [vmem:[#allocation3] sm:$0xf] %v345
  %v347 = vld [vmem:[#allocation2 + $0x8] sm:$0xff]
  %v348 = vld [vmem:[%s2] sm:$0xf]
  %v349 = vld [vmem:[%s2 + $0x4] sm:$0xf]
  %v350 = vld [vmem:[%s2 + $0x8] sm:$0xf]
  %v351 = vld [vmem:[%s2 + $0xc] sm:$0xf]
  %v352 = vld [vmem:[%s2 + $0x10] sm:$0xf]
  %v353 = vld [vmem:[%s2 + $0x14] sm:$0xf]
  %v354 = vld [vmem:[%s2 + $0x18] sm:$0xf]
  %v355 = vld [vmem:[%s2 + $0x1c] sm:$0xf]
  %v356 = vld [vmem:[%s2 + $0x20] sm:$0xf]
  %v357 = vld [vmem:[%s2 + $0x24] sm:$0xf]
  %v358 = vld [vmem:[%s2 + $0x28] sm:$0xf]
  %v359 = vld [vmem:[%s2 + $0x2c] sm:$0xf]
  %v360 = vld [vmem:[%s2 + $0x30] sm:$0xf]
  %v361 = vld [vmem:[%s2 + $0x34] sm:$0xf]
  %v362 = vld [vmem:[%s2 + $0x38] sm:$0xf]
  %v363 = vld [vmem:[%s2 + $0x3c] sm:$0xf]
  %v380 = vunpack.c.l.b16 %v348
  %v381 = vunpack.c.l.b16 %v349
  %v382 = vunpack.c.l.b16 %v350
  %v383 = vunpack.c.l.b16 %v351
  %v384 = vunpack.c.l.b16 %v352
  %v385 = vunpack.c.l.b16 %v353
  %v386 = vunpack.c.l.b16 %v354
  %v387 = vunpack.c.l.b16 %v355
  %v388 = vunpack.c.l.b16 %v356
  %v389 = vunpack.c.l.b16 %v357
  %v390 = vunpack.c.l.b16 %v358
  %v391 = vunpack.c.l.b16 %v359
  %v392 = vunpack.c.l.b16 %v360
  %v393 = vunpack.c.l.b16 %v361
  %v394 = vunpack.c.l.b16 %v362
  %v395 = vunpack.c.l.b16 %v363
  %v396 = vpack.c.b16 %v381, %v380
  %v397 = vpack.c.b16 %v383, %v382
  %v398 = vpack.c.b16 %v385, %v384
  %v399 = vpack.c.b16 %v387, %v386
  %v400 = vpack.c.b16 %v389, %v388
  %v401 = vpack.c.b16 %v391, %v390
  %v402 = vpack.c.b16 %v393, %v392
  %v403 = vpack.c.b16 %v395, %v394
  %412 = vmatprep.subr.bf16.mxu0 0
  %413 = vmatpush1.bf16.msra.mxu0 %v396
  %414 = vmatprep.subr.bf16.mxu0 0
  %415 = vmatpush1.bf16.msra.mxu0 %v397
  %416 = vmatprep.subr.bf16.mxu0 0
  %417 = vmatpush1.bf16.msra.mxu0 %v398
  %418 = vmatprep.subr.bf16.mxu0 0
  %419 = vmatpush1.bf16.msra.mxu0 %v399
  %420 = vmatprep.subr.bf16.mxu0 0
  %421 = vmatpush1.bf16.msra.mxu0 %v400
  %422 = vmatprep.subr.bf16.mxu0 0
  %423 = vmatpush1.bf16.msra.mxu0 %v401
  %424 = vmatprep.subr.bf16.mxu0 0
  %425 = vmatpush1.bf16.msra.mxu0 %v402
  %426 = vmatprep.subr.bf16.mxu0 0
  %427 = vmatpush1.bf16.msra.mxu0 %v403
  %428 = vmatprep.subr.bf16.mxu0 0
  %429 = vmatpush1.bf16.msra.mxu0 0
  %430 = vmatprep.subr.bf16.mxu0 0
  %431 = vmatpush1.bf16.msra.mxu0 0
  %432 = vmatprep.subr.bf16.mxu0 0
  %433 = vmatpush1.bf16.msra.mxu0 0
  %434 = vmatprep.subr.bf16.mxu0 0
  %435 = vmatpush1.bf16.msra.mxu0 0
  %436 = vmatprep.subr.bf16.mxu0 0
  %437 = vmatpush1.bf16.msra.mxu0 0
  %438 = vmatprep.subr.bf16.mxu0 0
  %439 = vmatpush1.bf16.msra.mxu0 0
  %440 = vmatprep.subr.bf16.mxu0 0
  %441 = vmatpush1.bf16.msra.mxu0 0
  %442 = vmatprep.subr.bf16.mxu0 0
  %443 = vmatpush1.bf16.msra.mxu0 0
  %444 = vmatprep.mubr.bf16.mxu0 0
  %445 = vmatmul.mubr.bf16.gmra.mrb[0].mxu0 %v345
  %v446 = vpop.f32.mrb[0].mxu0
  %v447 = vadd.f32 0.0, %v446
  %v448 = vpop.f32.mrb[0].mxu0
  %v449 = vpop.f32.mrb[0].mxu0
  %v450 = vpop.f32.mrb[0].mxu0
  %451 = vdwg.mxu0
  %v452 = vadd.f32 %v347, %v447
  %v453 = vxor.u32 %v452, 2147483648
  %v454 = vmul.f32 %v453, 1.442695
  %v455 = vpow.pop %v454
  %v456 = vadd.f32 %v455, 1.0
  %v457 = vrcp.pop %v456
  %v458 = vmul.f32 1.0, %v457
  %459 = vrot.lane.b32.xlu0 %v458, 64
  %v460 = vpop.permute.xlu0 %459
  %461 = vrot.lane.b32.xlu0 %v458, 32
  %v462 = vpop.permute.xlu0 %461
  %v463 = vadd.f32 %v447, %v220
  %v464 = vmul.f32 %v460, %v463
  %v465 = vadd.f32 %v347, %v464
  %v466 = vtanh.pop %v465
  %v467 = vsub.f32 %v344, %v466
  %v468 = vmul.f32 %v462, %v467
  %v469 = vadd.f32 %v466, %v468
  %v470 = vpack.c.bf16 %v469, %v469
  %v472 = vrot.slane %v470, 4
  %474 = vst [vmem:[#allocation3] sm:$0xf0] %v472
  %v475 = vld [vmem:[#allocation2 + $0x10] sm:$0xff]
  %v476 = vld [vmem:[%s2] sm:$0xf]
  %v477 = vld [vmem:[%s2 + $0x4] sm:$0xf]
  %v478 = vld [vmem:[%s2 + $0x8] sm:$0xf]
  %v479 = vld [vmem:[%s2 + $0xc] sm:$0xf]
  %v480 = vld [vmem:[%s2 + $0x10] sm:$0xf]
  %v481 = vld [vmem:[%s2 + $0x14] sm:$0xf]
  %v482 = vld [vmem:[%s2 + $0x18] sm:$0xf]
  %v483 = vld [vmem:[%s2 + $0x1c] sm:$0xf]
  %v484 = vld [vmem:[%s2 + $0x20] sm:$0xf]
  %v485 = vld [vmem:[%s2 + $0x24] sm:$0xf]
  %v486 = vld [vmem:[%s2 + $0x28] sm:$0xf]
  %v487 = vld [vmem:[%s2 + $0x2c] sm:$0xf]
  %v488 = vld [vmem:[%s2 + $0x30] sm:$0xf]
  %v489 = vld [vmem:[%s2 + $0x34] sm:$0xf]
  %v490 = vld [vmem:[%s2 + $0x38] sm:$0xf]
  %v491 = vld [vmem:[%s2 + $0x3c] sm:$0xf]
  %v508 = vunpack.c.l.b16 %v476
  %v509 = vunpack.c.l.b16 %v477
  %v510 = vunpack.c.l.b16 %v478
  %v511 = vunpack.c.l.b16 %v479
  %v512 = vunpack.c.l.b16 %v480
  %v513 = vunpack.c.l.b16 %v481
  %v514 = vunpack.c.l.b16 %v482
  %v515 = vunpack.c.l.b16 %v483
  %v516 = vunpack.c.l.b16 %v484
  %v517 = vunpack.c.l.b16 %v485
  %v518 = vunpack.c.l.b16 %v486
  %v519 = vunpack.c.l.b16 %v487
  %v520 = vunpack.c.l.b16 %v488
  %v521 = vunpack.c.l.b16 %v489
  %v522 = vunpack.c.l.b16 %v490
  %v523 = vunpack.c.l.b16 %v491
  %v524 = vpack.c.b16 %v509, %v508
  %v525 = vpack.c.b16 %v511, %v510
  %v526 = vpack.c.b16 %v513, %v512
  %v527 = vpack.c.b16 %v515, %v514
  %v528 = vpack.c.b16 %v517, %v516
  %v529 = vpack.c.b16 %v519, %v518
  %v530 = vpack.c.b16 %v521, %v520
  %v531 = vpack.c.b16 %v523, %v522
  %540 = vmatprep.subr.bf16.mxu0 0
  %541 = vmatpush1.bf16.msra.mxu0 %v524
  %542 = vmatprep.subr.bf16.mxu0 0
  %543 = vmatpush1.bf16.msra.mxu0 %v525
  %544 = vmatprep.subr.bf16.mxu0 0
  %545 = vmatpush1.bf16.msra.mxu0 %v526
  %546 = vmatprep.subr.bf16.mxu0 0
  %547 = vmatpush1.bf16.msra.mxu0 %v527
  %548 = vmatprep.subr.bf16.mxu0 0
  %549 = vmatpush1.bf16.msra.mxu0 %v528
  %550 = vmatprep.subr.bf16.mxu0 0
  %551 = vmatpush1.bf16.msra.mxu0 %v529
  %552 = vmatprep.subr.bf16.mxu0 0
  %553 = vmatpush1.bf16.msra.mxu0 %v530
  %554 = vmatprep.subr.bf16.mxu0 0
  %555 = vmatpush1.bf16.msra.mxu0 %v531
  %556 = vmatprep.subr.bf16.mxu0 0
  %557 = vmatpush1.bf16.msra.mxu0 0
  %558 = vmatprep.subr.bf16.mxu0 0
  %559 = vmatpush1.bf16.msra.mxu0 0
  %560 = vmatprep.subr.bf16.mxu0 0
  %561 = vmatpush1.bf16.msra.mxu0 0
  %562 = vmatprep.subr.bf16.mxu0 0
  %563 = vmatpush1.bf16.msra.mxu0 0
  %564 = vmatprep.subr.bf16.mxu0 0
  %565 = vmatpush1.bf16.msra.mxu0 0
  %566 = vmatprep.subr.bf16.mxu0 0
  %567 = vmatpush1.bf16.msra.mxu0 0
  %568 = vmatprep.subr.bf16.mxu0 0
  %569 = vmatpush1.bf16.msra.mxu0 0
  %570 = vmatprep.subr.bf16.mxu0 0
  %571 = vmatpush1.bf16.msra.mxu0 0
  %572 = vmatprep.mubr.bf16.mxu0 0
  %573 = vmatmul.mubr.bf16.gmra.mrb[0].mxu0 %v470
  %v574 = vpop.f32.mrb[0].mxu0
  %v575 = vadd.f32 0.0, %v574
  %v576 = vpop.f32.mrb[0].mxu0
  %v577 = vpop.f32.mrb[0].mxu0
  %v578 = vpop.f32.mrb[0].mxu0
  %579 = vdwg.mxu0
  %v580 = vadd.f32 %v475, %v575
  %v581 = vxor.u32 %v580, 2147483648
  %v582 = vmul.f32 %v581, 1.442695
  %v583 = vpow.pop %v582
  %v584 = vadd.f32 %v583, 1.0
  %v585 = vrcp.pop %v584
  %v586 = vmul.f32 1.0, %v585
  %587 = vrot.lane.b32.xlu0 %v586, 64
  %v588 = vpop.permute.xlu0 %587
  %589 = vrot.lane.b32.xlu0 %v586, 32
  %v590 = vpop.permute.xlu0 %589
  %v591 = vadd.f32 %v575, %v220
  %v592 = vmul.f32 %v588, %v591
  %v593 = vadd.f32 %v475, %v592
  %v594 = vtanh.pop %v593
  %v595 = vsub.f32 %v469, %v594
  %v596 = vmul.f32 %v590, %v595
  %v597 = vadd.f32 %v594, %v596
  %v598 = vpack.c.bf16 %v597, %v597
  %599 = vst [vmem:[#allocation3 + $0x8] sm:$0xf] %v598
  %v600 = vld [vmem:[#allocation2 + $0x18] sm:$0xff]
  %v601 = vld [vmem:[%s2] sm:$0xf]
  %v602 = vld [vmem:[%s2 + $0x4] sm:$0xf]
  %v603 = vld [vmem:[%s2 + $0x8] sm:$0xf]
  %v604 = vld [vmem:[%s2 + $0xc] sm:$0xf]
  %v605 = vld [vmem:[%s2 + $0x10] sm:$0xf]
  %v606 = vld [vmem:[%s2 + $0x14] sm:$0xf]
  %v607 = vld [vmem:[%s2 + $0x18] sm:$0xf]
  %v608 = vld [vmem:[%s2 + $0x1c] sm:$0xf]
  %v609 = vld [vmem:[%s2 + $0x20] sm:$0xf]
  %v610 = vld [vmem:[%s2 + $0x24] sm:$0xf]
  %v611 = vld [vmem:[%s2 + $0x28] sm:$0xf]
  %v612 = vld [vmem:[%s2 + $0x2c] sm:$0xf]
  %v613 = vld [vmem:[%s2 + $0x30] sm:$0xf]
  %v614 = vld [vmem:[%s2 + $0x34] sm:$0xf]
  %v615 = vld [vmem:[%s2 + $0x38] sm:$0xf]
  %v616 = vld [vmem:[%s2 + $0x3c] sm:$0xf]
  %v633 = vunpack.c.l.b16 %v601
  %v634 = vunpack.c.l.b16 %v602
  %v635 = vunpack.c.l.b16 %v603
  %v636 = vunpack.c.l.b16 %v604
  %v637 = vunpack.c.l.b16 %v605
  %v638 = vunpack.c.l.b16 %v606
  %v639 = vunpack.c.l.b16 %v607
  %v640 = vunpack.c.l.b16 %v608
  %v641 = vunpack.c.l.b16 %v609
  %v642 = vunpack.c.l.b16 %v610
  %v643 = vunpack.c.l.b16 %v611
  %v644 = vunpack.c.l.b16 %v612
  %v645 = vunpack.c.l.b16 %v613
  %v646 = vunpack.c.l.b16 %v614
  %v647 = vunpack.c.l.b16 %v615
  %v648 = vunpack.c.l.b16 %v616
  %v649 = vpack.c.b16 %v634, %v633
  %v650 = vpack.c.b16 %v636, %v635
  %v651 = vpack.c.b16 %v638, %v637
  %v652 = vpack.c.b16 %v640, %v639
  %v653 = vpack.c.b16 %v642, %v641
  %v654 = vpack.c.b16 %v644, %v643
  %v655 = vpack.c.b16 %v646, %v645
  %v656 = vpack.c.b16 %v648, %v647
  %665 = vmatprep.subr.bf16.mxu0 0
  %666 = vmatpush1.bf16.msra.mxu0 %v649
  %667 = vmatprep.subr.bf16.mxu0 0
  %668 = vmatpush1.bf16.msra.mxu0 %v650
  %669 = vmatprep.subr.bf16.mxu0 0
  %670 = vmatpush1.bf16.msra.mxu0 %v651
  %671 = vmatprep.subr.bf16.mxu0 0
  %672 = vmatpush1.bf16.msra.mxu0 %v652
  %673 = vmatprep.subr.bf16.mxu0 0
  %674 = vmatpush1.bf16.msra.mxu0 %v653
  %675 = vmatprep.subr.bf16.mxu0 0
  %676 = vmatpush1.bf16.msra.mxu0 %v654
  %677 = vmatprep.subr.bf16.mxu0 0
  %678 = vmatpush1.bf16.msra.mxu0 %v655
  %679 = vmatprep.subr.bf16.mxu0 0
  %680 = vmatpush1.bf16.msra.mxu0 %v656
  %681 = vmatprep.subr.bf16.mxu0 0
  %682 = vmatpush1.bf16.msra.mxu0 0
  %683 = vmatprep.subr.bf16.mxu0 0
  %684 = vmatpush1.bf16.msra.mxu0 0
  %685 = vmatprep.subr.bf16.mxu0 0
  %686 = vmatpush1.bf16.msra.mxu0 0
  %687 = vmatprep.subr.bf16.mxu0 0
  %688 = vmatpush1.bf16.msra.mxu0 0
  %689 = vmatprep.subr.bf16.mxu0 0
  %690 = vmatpush1.bf16.msra.mxu0 0
  %691 = vmatprep.subr.bf16.mxu0 0
  %692 = vmatpush1.bf16.msra.mxu0 0
  %693 = vmatprep.subr.bf16.mxu0 0
  %694 = vmatpush1.bf16.msra.mxu0 0
  %695 = vmatprep.subr.bf16.mxu0 0
  %696 = vmatpush1.bf16.msra.mxu0 0
  %697 = vmatprep.mubr.bf16.mxu0 0
  %698 = vmatmul.mubr.bf16.gmra.mrb[0].mxu0 %v598
  %v699 = vpop.f32.mrb[0].mxu0
  %v700 = vadd.f32 0.0, %v699
  %v701 = vpop.f32.mrb[0].mxu0
  %v702 = vpop.f32.mrb[0].mxu0
  %v703 = vpop.f32.mrb[0].mxu0
  %704 = vdwg.mxu0
  %v705 = vadd.f32 %v600, %v700
  %v706 = vxor.u32 %v705, 2147483648
  %v707 = vmul.f32 %v706, 1.442695
  %v708 = vpow.pop %v707
  %v709 = vadd.f32 %v708, 1.0
  %v710 = vrcp.pop %v709
  %v711 = vmul.f32 1.0, %v710
  %712 = vrot.lane.b32.xlu0 %v711, 64
  %v713 = vpop.permute.xlu0 %712
  %714 = vrot.lane.b32.xlu0 %v711, 32
  %v715 = vpop.permute.xlu0 %714
  %v716 = vadd.f32 %v700, %v220
  %v717 = vmul.f32 %v713, %v716
  %v718 = vadd.f32 %v600, %v717
  %v719 = vtanh.pop %v718
  %v720 = vsub.f32 %v597, %v719
  %v721 = vmul.f32 %v715, %v720
  %v722 = vadd.f32 %v719, %v721
  %v723 = vpack.c.bf16 %v722, %v722
  %v725 = vrot.slane %v723, 4
  %727 = vst [vmem:[#allocation3 + $0x8] sm:$0xf0] %v725
  %v728 = vld [vmem:[#allocation2 + $0x20] sm:$0xff]
  %v729 = vld [vmem:[%s2] sm:$0xf]
  %v730 = vld [vmem:[%s2 + $0x4] sm:$0xf]
  %v731 = vld [vmem:[%s2 + $0x8] sm:$0xf]
  %v732 = vld [vmem:[%s2 + $0xc] sm:$0xf]
  %v733 = vld [vmem:[%s2 + $0x10] sm:$0xf]
  %v734 = vld [vmem:[%s2 + $0x14] sm:$0xf]
  %v735 = vld [vmem:[%s2 + $0x18] sm:$0xf]
  %v736 = vld [vmem:[%s2 + $0x1c] sm:$0xf]
  %v737 = vld [vmem:[%s2 + $0x20] sm:$0xf]
  %v738 = vld [vmem:[%s2 + $0x24] sm:$0xf]
  %v739 = vld [vmem:[%s2 + $0x28] sm:$0xf]
  %v740 = vld [vmem:[%s2 + $0x2c] sm:$0xf]
  %v741 = vld [vmem:[%s2 + $0x30] sm:$0xf]
  %v742 = vld [vmem:[%s2 + $0x34] sm:$0xf]
  %v743 = vld [vmem:[%s2 + $0x38] sm:$0xf]
  %v744 = vld [vmem:[%s2 + $0x3c] sm:$0xf]
  %v761 = vunpack.c.l.b16 %v729
  %v762 = vunpack.c.l.b16 %v730
  %v763 = vunpack.c.l.b16 %v731
  %v764 = vunpack.c.l.b16 %v732
  %v765 = vunpack.c.l.b16 %v733
  %v766 = vunpack.c.l.b16 %v734
  %v767 = vunpack.c.l.b16 %v735
  %v768 = vunpack.c.l.b16 %v736
  %v769 = vunpack.c.l.b16 %v737
  %v770 = vunpack.c.l.b16 %v738
  %v771 = vunpack.c.l.b16 %v739
  %v772 = vunpack.c.l.b16 %v740
  %v773 = vunpack.c.l.b16 %v741
  %v774 = vunpack.c.l.b16 %v742
  %v775 = vunpack.c.l.b16 %v743
  %v776 = vunpack.c.l.b16 %v744
  %v777 = vpack.c.b16 %v762, %v761
  %v778 = vpack.c.b16 %v764, %v763
  %v779 = vpack.c.b16 %v766, %v765
  %v780 = vpack.c.b16 %v768, %v767
  %v781 = vpack.c.b16 %v770, %v769
  %v782 = vpack.c.b16 %v772, %v771
  %v783 = vpack.c.b16 %v774, %v773
  %v784 = vpack.c.b16 %v776, %v775
  %793 = vmatprep.subr.bf16.mxu0 0
  %794 = vmatpush1.bf16.msra.mxu0 %v777
  %795 = vmatprep.subr.bf16.mxu0 0
  %796 = vmatpush1.bf16.msra.mxu0 %v778
  %797 = vmatprep.subr.bf16.mxu0 0
  %798 = vmatpush1.bf16.msra.mxu0 %v779
  %799 = vmatprep.subr.bf16.mxu0 0
  %800 = vmatpush1.bf16.msra.mxu0 %v780
  %801 = vmatprep.subr.bf16.mxu0 0
  %802 = vmatpush1.bf16.msra.mxu0 %v781
  %803 = vmatprep.subr.bf16.mxu0 0
  %804 = vmatpush1.bf16.msra.mxu0 %v782
  %805 = vmatprep.subr.bf16.mxu0 0
  %806 = vmatpush1.bf16.msra.mxu0 %v783
  %807 = vmatprep.subr.bf16.mxu0 0
  %808 = vmatpush1.bf16.msra.mxu0 %v784
  %809 = vmatprep.subr.bf16.mxu0 0
  %810 = vmatpush1.bf16.msra.mxu0 0
  %811 = vmatprep.subr.bf16.mxu0 0
  %812 = vmatpush1.bf16.msra.mxu0 0
  %813 = vmatprep.subr.bf16.mxu0 0
  %814 = vmatpush1.bf16.msra.mxu0 0
  %815 = vmatprep.subr.bf16.mxu0 0
  %816 = vmatpush1.bf16.msra.mxu0 0
  %817 = vmatprep.subr.bf16.mxu0 0
  %818 = vmatpush1.bf16.msra.mxu0 0
  %819 = vmatprep.subr.bf16.mxu0 0
  %820 = vmatpush1.bf16.msra.mxu0 0
  %821 = vmatprep.subr.bf16.mxu0 0
  %822 = vmatpush1.bf16.msra.mxu0 0
  %823 = vmatprep.subr.bf16.mxu0 0
  %824 = vmatpush1.bf16.msra.mxu0 0
  %825 = vmatprep.mubr.bf16.mxu0 0
  %826 = vmatmul.mubr.bf16.gmra.mrb[0].mxu0 %v723
  %v827 = vpop.f32.mrb[0].mxu0
  %v828 = vadd.f32 0.0, %v827
  %v829 = vpop.f32.mrb[0].mxu0
  %v830 = vpop.f32.mrb[0].mxu0
  %v831 = vpop.f32.mrb[0].mxu0
  %832 = vdwg.mxu0
  %v833 = vadd.f32 %v728, %v828
  %v834 = vxor.u32 %v833, 2147483648
  %v835 = vmul.f32 %v834, 1.442695
  %v836 = vpow.pop %v835
  %v837 = vadd.f32 %v836, 1.0
  %v838 = vrcp.pop %v837
  %v839 = vmul.f32 1.0, %v838
  %840 = vrot.lane.b32.xlu0 %v839, 64
  %v841 = vpop.permute.xlu0 %840
  %842 = vrot.lane.b32.xlu0 %v839, 32
  %v843 = vpop.permute.xlu0 %842
  %v844 = vadd.f32 %v828, %v220
  %v845 = vmul.f32 %v841, %v844
  %v846 = vadd.f32 %v728, %v845
  %v847 = vtanh.pop %v846
  %v848 = vsub.f32 %v722, %v847
  %v849 = vmul.f32 %v843, %v848
  %v850 = vadd.f32 %v847, %v849
  %v851 = vpack.c.bf16 %v850, %v850
  %852 = vst [vmem:[#allocation3 + $0x10] sm:$0xf] %v851
  %v853 = vld [vmem:[#allocation2 + $0x28] sm:$0xff]
  %v854 = vld [vmem:[%s2] sm:$0xf]
  %v855 = vld [vmem:[%s2 + $0x4] sm:$0xf]
  %v856 = vld [vmem:[%s2 + $0x8] sm:$0xf]
  %v857 = vld [vmem:[%s2 + $0xc] sm:$0xf]
  %v858 = vld [vmem:[%s2 + $0x10] sm:$0xf]
  %v859 = vld [vmem:[%s2 + $0x14] sm:$0xf]
  %v860 = vld [vmem:[%s2 + $0x18] sm:$0xf]
  %v861 = vld [vmem:[%s2 + $0x1c] sm:$0xf]
  %v862 = vld [vmem:[%s2 + $0x20] sm:$0xf]
  %v863 = vld [vmem:[%s2 + $0x24] sm:$0xf]
  %v864 = vld [vmem:[%s2 + $0x28] sm:$0xf]
  %v865 = vld [vmem:[%s2 + $0x2c] sm:$0xf]
  %v866 = vld [vmem:[%s2 + $0x30] sm:$0xf]
  %v867 = vld [vmem:[%s2 + $0x34] sm:$0xf]
  %v868 = vld [vmem:[%s2 + $0x38] sm:$0xf]
  %v869 = vld [vmem:[%s2 + $0x3c] sm:$0xf]
  %v886 = vunpack.c.l.b16 %v854
  %v887 = vunpack.c.l.b16 %v855
  %v888 = vunpack.c.l.b16 %v856
  %v889 = vunpack.c.l.b16 %v857
  %v890 = vunpack.c.l.b16 %v858
  %v891 = vunpack.c.l.b16 %v859
  %v892 = vunpack.c.l.b16 %v860
  %v893 = vunpack.c.l.b16 %v861
  %v894 = vunpack.c.l.b16 %v862
  %v895 = vunpack.c.l.b16 %v863
  %v896 = vunpack.c.l.b16 %v864
  %v897 = vunpack.c.l.b16 %v865
  %v898 = vunpack.c.l.b16 %v866
  %v899 = vunpack.c.l.b16 %v867
  %v900 = vunpack.c.l.b16 %v868
  %v901 = vunpack.c.l.b16 %v869
  %v902 = vpack.c.b16 %v887, %v886
  %v903 = vpack.c.b16 %v889, %v888
  %v904 = vpack.c.b16 %v891, %v890
  %v905 = vpack.c.b16 %v893, %v892
  %v906 = vpack.c.b16 %v895, %v894
  %v907 = vpack.c.b16 %v897, %v896
  %v908 = vpack.c.b16 %v899, %v898
  %v909 = vpack.c.b16 %v901, %v900
  %918 = vmatprep.subr.bf16.mxu0 0
  %919 = vmatpush1.bf16.msra.mxu0 %v902
  %920 = vmatprep.subr.bf16.mxu0 0
  %921 = vmatpush1.bf16.msra.mxu0 %v903
  %922 = vmatprep.subr.bf16.mxu0 0
  %923 = vmatpush1.bf16.msra.mxu0 %v904
  %924 = vmatprep.subr.bf16.mxu0 0
  %925 = vmatpush1.bf16.msra.mxu0 %v905
  %926 = vmatprep.subr.bf16.mxu0 0
  %927 = vmatpush1.bf16.msra.mxu0 %v906
  %928 = vmatprep.subr.bf16.mxu0 0
  %929 = vmatpush1.bf16.msra.mxu0 %v907
  %930 = vmatprep.subr.bf16.mxu0 0
  %931 = vmatpush1.bf16.msra.mxu0 %v908
  %932 = vmatprep.subr.bf16.mxu0 0
  %933 = vmatpush1.bf16.msra.mxu0 %v909
  %934 = vmatprep.subr.bf16.mxu0 0
  %935 = vmatpush1.bf16.msra.mxu0 0
  %936 = vmatprep.subr.bf16.mxu0 0
  %937 = vmatpush1.bf16.msra.mxu0 0
  %938 = vmatprep.subr.bf16.mxu0 0
  %939 = vmatpush1.bf16.msra.mxu0 0
  %940 = vmatprep.subr.bf16.mxu0 0
  %941 = vmatpush1.bf16.msra.mxu0 0
  %942 = vmatprep.subr.bf16.mxu0 0
  %943 = vmatpush1.bf16.msra.mxu0 0
  %944 = vmatprep.subr.bf16.mxu0 0
  %945 = vmatpush1.bf16.msra.mxu0 0
  %946 = vmatprep.subr.bf16.mxu0 0
  %947 = vmatpush1.bf16.msra.mxu0 0
  %948 = vmatprep.subr.bf16.mxu0 0
  %949 = vmatpush1.bf16.msra.mxu0 0
  %950 = vmatprep.mubr.bf16.mxu0 0
  %951 = vmatmul.mubr.bf16.gmra.mrb[0].mxu0 %v851
  %v952 = vpop.f32.mrb[0].mxu0
  %v953 = vadd.f32 0.0, %v952
  %v954 = vpop.f32.mrb[0].mxu0
  %v955 = vpop.f32.mrb[0].mxu0
  %v956 = vpop.f32.mrb[0].mxu0
  %957 = vdwg.mxu0
  %v958 = vadd.f32 %v853, %v953
  %v959 = vxor.u32 %v958, 2147483648
  %v960 = vmul.f32 %v959, 1.442695
  %v961 = vpow.pop %v960
  %v962 = vadd.f32 %v961, 1.0
  %v963 = vrcp.pop %v962
  %v964 = vmul.f32 1.0, %v963
  %965 = vrot.lane.b32.xlu0 %v964, 64
  %v966 = vpop.permute.xlu0 %965
  %967 = vrot.lane.b32.xlu0 %v964, 32
  %v968 = vpop.permute.xlu0 %967
  %v969 = vadd.f32 %v953, %v220
  %v970 = vmul.f32 %v966, %v969
  %v971 = vadd.f32 %v853, %v970
  %v972 = vtanh.pop %v971
  %v973 = vsub.f32 %v850, %v972
  %v974 = vmul.f32 %v968, %v973
  %v975 = vadd.f32 %v972, %v974
  %v976 = vpack.c.bf16 %v975, %v975
  %v978 = vrot.slane %v976, 4
  %980 = vst [vmem:[#allocation3 + $0x10] sm:$0xf0] %v978
  %v981 = vld [vmem:[#allocation2 + $0x30] sm:$0xff]
  %v982 = vld [vmem:[%s2] sm:$0xf]
  %v983 = vld [vmem:[%s2 + $0x4] sm:$0xf]
  %v984 = vld [vmem:[%s2 + $0x8] sm:$0xf]
  %v985 = vld [vmem:[%s2 + $0xc] sm:$0xf]
  %v986 = vld [vmem:[%s2 + $0x10] sm:$0xf]
  %v987 = vld [vmem:[%s2 + $0x14] sm:$0xf]
  %v988 = vld [vmem:[%s2 + $0x18] sm:$0xf]
  %v989 = vld [vmem:[%s2 + $0x1c] sm:$0xf]
  %v990 = vld [vmem:[%s2 + $0x20] sm:$0xf]
  %v991 = vld [vmem:[%s2 + $0x24] sm:$0xf]
  %v992 = vld [vmem:[%s2 + $0x28] sm:$0xf]
  %v993 = vld [vmem:[%s2 + $0x2c] sm:$0xf]
  %v994 = vld [vmem:[%s2 + $0x30] sm:$0xf]
  %v995 = vld [vmem:[%s2 + $0x34] sm:$0xf]
  %v996 = vld [vmem:[%s2 + $0x38] sm:$0xf]
  %v997 = vld [vmem:[%s2 + $0x3c] sm:$0xf]
  %v1014 = vunpack.c.l.b16 %v982
  %v1015 = vunpack.c.l.b16 %v983
  %v1016 = vunpack.c.l.b16 %v984
  %v1017 = vunpack.c.l.b16 %v985
  %v1018 = vunpack.c.l.b16 %v986
  %v1019 = vunpack.c.l.b16 %v987
  %v1020 = vunpack.c.l.b16 %v988
  %v1021 = vunpack.c.l.b16 %v989
  %v1022 = vunpack.c.l.b16 %v990
  %v1023 = vunpack.c.l.b16 %v991
  %v1024 = vunpack.c.l.b16 %v992
  %v1025 = vunpack.c.l.b16 %v993
  %v1026 = vunpack.c.l.b16 %v994
  %v1027 = vunpack.c.l.b16 %v995
  %v1028 = vunpack.c.l.b16 %v996
  %v1029 = vunpack.c.l.b16 %v997
  %v1030 = vpack.c.b16 %v1015, %v1014
  %v1031 = vpack.c.b16 %v1017, %v1016
  %v1032 = vpack.c.b16 %v1019, %v1018
  %v1033 = vpack.c.b16 %v1021, %v1020
  %v1034 = vpack.c.b16 %v1023, %v1022
  %v1035 = vpack.c.b16 %v1025, %v1024
  %v1036 = vpack.c.b16 %v1027, %v1026
  %v1037 = vpack.c.b16 %v1029, %v1028
  %1046 = vmatprep.subr.bf16.mxu0 0
  %1047 = vmatpush1.bf16.msra.mxu0 %v1030
  %1048 = vmatprep.subr.bf16.mxu0 0
  %1049 = vmatpush1.bf16.msra.mxu0 %v1031
  %1050 = vmatprep.subr.bf16.mxu0 0
  %1051 = vmatpush1.bf16.msra.mxu0 %v1032
  %1052 = vmatprep.subr.bf16.mxu0 0
  %1053 = vmatpush1.bf16.msra.mxu0 %v1033
  %1054 = vmatprep.subr.bf16.mxu0 0
  %1055 = vmatpush1.bf16.msra.mxu0 %v1034
  %1056 = vmatprep.subr.bf16.mxu0 0
  %1057 = vmatpush1.bf16.msra.mxu0 %v1035
  %1058 = vmatprep.subr.bf16.mxu0 0
  %1059 = vmatpush1.bf16.msra.mxu0 %v1036
  %1060 = vmatprep.subr.bf16.mxu0 0
  %1061 = vmatpush1.bf16.msra.mxu0 %v1037
  %1062 = vmatprep.subr.bf16.mxu0 0
  %1063 = vmatpush1.bf16.msra.mxu0 0
  %1064 = vmatprep.subr.bf16.mxu0 0
  %1065 = vmatpush1.bf16.msra.mxu0 0
  %1066 = vmatprep.subr.bf16.mxu0 0
  %1067 = vmatpush1.bf16.msra.mxu0 0
  %1068 = vmatprep.subr.bf16.mxu0 0
  %1069 = vmatpush1.bf16.msra.mxu0 0
  %1070 = vmatprep.subr.bf16.mxu0 0
  %1071 = vmatpush1.bf16.msra.mxu0 0
  %1072 = vmatprep.subr.bf16.mxu0 0
  %1073 = vmatpush1.bf16.msra.mxu0 0
  %1074 = vmatprep.subr.bf16.mxu0 0
  %1075 = vmatpush1.bf16.msra.mxu0 0
  %1076 = vmatprep.subr.bf16.mxu0 0
  %1077 = vmatpush1.bf16.msra.mxu0 0
  %1078 = vmatprep.mubr.bf16.mxu0 0
  %1079 = vmatmul.mubr.bf16.gmra.mrb[0].mxu0 %v976
  %v1080 = vpop.f32.mrb[0].mxu0
  %v1081 = vadd.f32 0.0, %v1080
  %v1082 = vpop.f32.mrb[0].mxu0
  %v1083 = vpop.f32.mrb[0].mxu0
  %v1084 = vpop.f32.mrb[0].mxu0
  %1085 = vdwg.mxu0
  %v1086 = vadd.f32 %v981, %v1081
  %v1087 = vxor.u32 %v1086, 2147483648
  %v1088 = vmul.f32 %v1087, 1.442695
  %v1089 = vpow.pop %v1088
  %v1090 = vadd.f32 %v1089, 1.0
  %v1091 = vrcp.pop %v1090
  %v1092 = vmul.f32 1.0, %v1091
  %1093 = vrot.lane.b32.xlu0 %v1092, 64
  %v1094 = vpop.permute.xlu0 %1093
  %1095 = vrot.lane.b32.xlu0 %v1092, 32
  %v1096 = vpop.permute.xlu0 %1095
  %v1097 = vadd.f32 %v1081, %v220
  %v1098 = vmul.f32 %v1094, %v1097
  %v1099 = vadd.f32 %v981, %v1098
  %v1100 = vtanh.pop %v1099
  %v1101 = vsub.f32 %v975, %v1100
  %v1102 = vmul.f32 %v1096, %v1101
  %v1103 = vadd.f32 %v1100, %v1102
  %v1104 = vpack.c.bf16 %v1103, %v1103
  %1105 = vst [vmem:[#allocation3 + $0x18] sm:$0xf] %v1104
  %v1106 = vld [vmem:[#allocation2 + $0x38] sm:$0xff]
  %v1107 = vld [vmem:[%s2] sm:$0xf]
  %v1108 = vld [vmem:[%s2 + $0x4] sm:$0xf]
  %v1109 = vld [vmem:[%s2 + $0x8] sm:$0xf]
  %v1110 = vld [vmem:[%s2 + $0xc] sm:$0xf]
  %v1111 = vld [vmem:[%s2 + $0x10] sm:$0xf]
  %v1112 = vld [vmem:[%s2 + $0x14] sm:$0xf]
  %v1113 = vld [vmem:[%s2 + $0x18] sm:$0xf]
  %v1114 = vld [vmem:[%s2 + $0x1c] sm:$0xf]
  %v1115 = vld [vmem:[%s2 + $0x20] sm:$0xf]
  %v1116 = vld [vmem:[%s2 + $0x24] sm:$0xf]
  %v1117 = vld [vmem:[%s2 + $0x28] sm:$0xf]
  %v1118 = vld [vmem:[%s2 + $0x2c] sm:$0xf]
  %v1119 = vld [vmem:[%s2 + $0x30] sm:$0xf]
  %v1120 = vld [vmem:[%s2 + $0x34] sm:$0xf]
  %v1121 = vld [vmem:[%s2 + $0x38] sm:$0xf]
  %v1122 = vld [vmem:[%s2 + $0x3c] sm:$0xf]
  %v1139 = vunpack.c.l.b16 %v1107
  %v1140 = vunpack.c.l.b16 %v1108
  %v1141 = vunpack.c.l.b16 %v1109
  %v1142 = vunpack.c.l.b16 %v1110
  %v1143 = vunpack.c.l.b16 %v1111
  %v1144 = vunpack.c.l.b16 %v1112
  %v1145 = vunpack.c.l.b16 %v1113
  %v1146 = vunpack.c.l.b16 %v1114
  %v1147 = vunpack.c.l.b16 %v1115
  %v1148 = vunpack.c.l.b16 %v1116
  %v1149 = vunpack.c.l.b16 %v1117
  %v1150 = vunpack.c.l.b16 %v1118
  %v1151 = vunpack.c.l.b16 %v1119
  %v1152 = vunpack.c.l.b16 %v1120
  %v1153 = vunpack.c.l.b16 %v1121
  %v1154 = vunpack.c.l.b16 %v1122
  %v1155 = vpack.c.b16 %v1140, %v1139
  %v1156 = vpack.c.b16 %v1142, %v1141
  %v1157 = vpack.c.b16 %v1144, %v1143
  %v1158 = vpack.c.b16 %v1146, %v1145
  %v1159 = vpack.c.b16 %v1148, %v1147
  %v1160 = vpack.c.b16 %v1150, %v1149
  %v1161 = vpack.c.b16 %v1152, %v1151
  %v1162 = vpack.c.b16 %v1154, %v1153
  %1171 = vmatprep.subr.bf16.mxu0 0
  %1172 = vmatpush1.bf16.msra.mxu0 %v1155
  %1173 = vmatprep.subr.bf16.mxu0 0
  %1174 = vmatpush1.bf16.msra.mxu0 %v1156
  %1175 = vmatprep.subr.bf16.mxu0 0
  %1176 = vmatpush1.bf16.msra.mxu0 %v1157
  %1177 = vmatprep.subr.bf16.mxu0 0
  %1178 = vmatpush1.bf16.msra.mxu0 %v1158
  %1179 = vmatprep.subr.bf16.mxu0 0
  %1180 = vmatpush1.bf16.msra.mxu0 %v1159
  %1181 = vmatprep.subr.bf16.mxu0 0
  %1182 = vmatpush1.bf16.msra.mxu0 %v1160
  %1183 = vmatprep.subr.bf16.mxu0 0
  %1184 = vmatpush1.bf16.msra.mxu0 %v1161
  %1185 = vmatprep.subr.bf16.mxu0 0
  %1186 = vmatpush1.bf16.msra.mxu0 %v1162
  %1187 = vmatprep.subr.bf16.mxu0 0
  %1188 = vmatpush1.bf16.msra.mxu0 0
  %1189 = vmatprep.subr.bf16.mxu0 0
  %1190 = vmatpush1.bf16.msra.mxu0 0
  %1191 = vmatprep.subr.bf16.mxu0 0
  %1192 = vmatpush1.bf16.msra.mxu0 0
  %1193 = vmatprep.subr.bf16.mxu0 0
  %1194 = vmatpush1.bf16.msra.mxu0 0
  %1195 = vmatprep.subr.bf16.mxu0 0
  %1196 = vmatpush1.bf16.msra.mxu0 0
  %1197 = vmatprep.subr.bf16.mxu0 0
  %1198 = vmatpush1.bf16.msra.mxu0 0
  %1199 = vmatprep.subr.bf16.mxu0 0
  %1200 = vmatpush1.bf16.msra.mxu0 0
  %1201 = vmatprep.subr.bf16.mxu0 0
  %1202 = vmatpush1.bf16.msra.mxu0 0
  %1203 = vmatprep.mubr.bf16.mxu0 0
  %1204 = vmatmul.mubr.bf16.gmra.mrb[0].mxu0 %v1104
  %v1205 = vpop.f32.mrb[0].mxu0
  %v1206 = vadd.f32 0.0, %v1205
  %v1207 = vpop.f32.mrb[0].mxu0
  %v1208 = vpop.f32.mrb[0].mxu0
  %v1209 = vpop.f32.mrb[0].mxu0
  %1210 = vdwg.mxu0
  %v1211 = vadd.f32 %v1106, %v1206
  %v1212 = vxor.u32 %v1211, 2147483648
  %v1213 = vmul.f32 %v1212, 1.442695
  %v1214 = vpow.pop %v1213
  %v1215 = vadd.f32 %v1214, 1.0
  %v1216 = vrcp.pop %v1215
  %v1217 = vmul.f32 1.0, %v1216
  %1218 = vrot.lane.b32.xlu0 %v1217, 64
  %v1219 = vpop.permute.xlu0 %1218
  %1220 = vrot.lane.b32.xlu0 %v1217, 32
  %v1221 = vpop.permute.xlu0 %1220
  %v1222 = vadd.f32 %v1206, %v220
  %v1223 = vmul.f32 %v1219, %v1222
  %v1224 = vadd.f32 %v1106, %v1223
  %v1225 = vtanh.pop %v1224
  %v1226 = vsub.f32 %v1103, %v1225
  %v1227 = vmul.f32 %v1221, %v1226
  %v1228 = vadd.f32 %v1225, %v1227
  %v1229 = vpack.c.bf16 %v1228, %v1228
  %v1231 = vrot.slane %v1229, 4
  %1233 = vst [vmem:[#allocation3 + $0x18] sm:$0xf0] %v1231
  %v1234 = vld [vmem:[%s7] sm:$0x1]
  %v1235 = vld [vmem:[%s8] sm:$0x1]
  %v1236 = vld [vmem:[#allocation3] sm:$0xff]
  %v1237 = vld [vmem:[#allocation3 + $0x8] sm:$0xff]
  %v1238 = vld [vmem:[#allocation3 + $0x10] sm:$0xff]
  %v1239 = vld [vmem:[#allocation3 + $0x18] sm:$0xff]
  %v1240 = vld [vmem:[%s5] sm:$0xf]
  %v1241 = vld [vmem:[%s5 + $0x4] sm:$0xf]
  %v1242 = vld [vmem:[%s5 + $0x8] sm:$0xf]
  %v1243 = vld [vmem:[%s5 + $0xc] sm:$0xf]
  %v1244 = vld [vmem:[%s5 + $0x10] sm:$0xf]
  %v1245 = vld [vmem:[%s5 + $0x14] sm:$0xf]
  %v1246 = vld [vmem:[%s5 + $0x18] sm:$0xf]
  %v1247 = vld [vmem:[%s5 + $0x1c] sm:$0xf]
  %v1248 = vld [vmem:[%s5 + $0x20] sm:$0xf]
  %v1249 = vld [vmem:[%s5 + $0x24] sm:$0xf]
  %v1250 = vld [vmem:[%s5 + $0x28] sm:$0xf]
  %v1251 = vld [vmem:[%s5 + $0x2c] sm:$0xf]
  %v1252 = vld [vmem:[%s5 + $0x30] sm:$0xf]
  %v1253 = vld [vmem:[%s5 + $0x34] sm:$0xf]
  %v1254 = vld [vmem:[%s5 + $0x38] sm:$0xf]
  %v1255 = vld [vmem:[%s5 + $0x3c] sm:$0xf]
  %v1257 = vlaneseq
  %v1258 = vshrl.u32 %v1257, 7
  %v1259 = vsub.s32 0, %v1258
  %v1260 = vrot.slane %v1234, %v1259
  %v1278 = vunpack.c.l.b16 %v1240
  %v1279 = vunpack.c.l.b16 %v1241
  %v1280 = vunpack.c.l.b16 %v1242
  %v1281 = vunpack.c.l.b16 %v1243
  %v1282 = vunpack.c.l.b16 %v1244
  %v1283 = vunpack.c.l.b16 %v1245
  %v1284 = vunpack.c.l.b16 %v1246
  %v1285 = vunpack.c.l.b16 %v1247
  %v1286 = vunpack.c.l.b16 %v1248
  %v1287 = vunpack.c.l.b16 %v1249
  %v1288 = vunpack.c.l.b16 %v1250
  %v1289 = vunpack.c.l.b16 %v1251
  %v1290 = vunpack.c.l.b16 %v1252
  %v1291 = vunpack.c.l.b16 %v1253
  %v1292 = vunpack.c.l.b16 %v1254
  %v1293 = vunpack.c.l.b16 %v1255
  %v1294 = vpack.c.b16 %v1279, %v1278
  %v1295 = vpack.c.b16 %v1281, %v1280
  %v1296 = vpack.c.b16 %v1283, %v1282
  %v1297 = vpack.c.b16 %v1285, %v1284
  %v1298 = vpack.c.b16 %v1287, %v1286
  %v1299 = vpack.c.b16 %v1289, %v1288
  %v1300 = vpack.c.b16 %v1291, %v1290
  %v1301 = vpack.c.b16 %v1293, %v1292
  %1310 = vmatprep.subr.bf16.mxu0 0
  %1311 = vmatpush1.bf16.msra.mxu0 %v1294
  %1312 = vmatprep.subr.bf16.mxu0 0
  %1313 = vmatpush1.bf16.msra.mxu0 %v1295
  %1314 = vmatprep.subr.bf16.mxu0 0
  %1315 = vmatpush1.bf16.msra.mxu0 %v1296
  %1316 = vmatprep.subr.bf16.mxu0 0
  %1317 = vmatpush1.bf16.msra.mxu0 %v1297
  %1318 = vmatprep.subr.bf16.mxu0 0
  %1319 = vmatpush1.bf16.msra.mxu0 %v1298
  %1320 = vmatprep.subr.bf16.mxu0 0
  %1321 = vmatpush1.bf16.msra.mxu0 %v1299
  %1322 = vmatprep.subr.bf16.mxu0 0
  %1323 = vmatpush1.bf16.msra.mxu0 %v1300
  %1324 = vmatprep.subr.bf16.mxu0 0
  %1325 = vmatpush1.bf16.msra.mxu0 %v1301
  %1326 = vmatprep.subr.bf16.mxu0 0
  %1327 = vmatpush1.bf16.msra.mxu0 0
  %1328 = vmatprep.subr.bf16.mxu0 0
  %1329 = vmatpush1.bf16.msra.mxu0 0
  %1330 = vmatprep.subr.bf16.mxu0 0
  %1331 = vmatpush1.bf16.msra.mxu0 0
  %1332 = vmatprep.subr.bf16.mxu0 0
  %1333 = vmatpush1.bf16.msra.mxu0 0
  %1334 = vmatprep.subr.bf16.mxu0 0
  %1335 = vmatpush1.bf16.msra.mxu0 0
  %1336 = vmatprep.subr.bf16.mxu0 0
  %1337 = vmatpush1.bf16.msra.mxu0 0
  %1338 = vmatprep.subr.bf16.mxu0 0
  %1339 = vmatpush1.bf16.msra.mxu0 0
  %1340 = vmatprep.subr.bf16.mxu0 0
  %1341 = vmatpush1.bf16.msra.mxu0 0
  %1342 = vmatprep.mubr.bf16.mxu0 0
  %1343 = vmatmul.mubr.bf16.gmra.mrb[0].mxu0 %v1236
  %v1344 = vpop.f32.mrb[0].mxu0
  %v1345 = vadd.f32 %v1260, %v1344
  %v1346 = vpop.f32.mrb[0].mxu0
  %v1347 = vpop.f32.mrb[0].mxu0
  %v1348 = vadd.f32 %v1260, %v1347
  %v1349 = vpop.f32.mrb[0].mxu0
  %1350 = vmatprep.mubr.bf16.mxu0 0
  %1351 = vmatmul.mubr.bf16.gmra.mrb[0].mxu0 %v1237
  %v1352 = vpop.f32.mrb[0].mxu0
  %v1353 = vadd.f32 %v1260, %v1352
  %v1354 = vpop.f32.mrb[0].mxu0
  %v1355 = vpop.f32.mrb[0].mxu0
  %v1356 = vadd.f32 %v1260, %v1355
  %v1357 = vpop.f32.mrb[0].mxu0
  %1358 = vmatprep.mubr.bf16.mxu0 0
  %1359 = vmatmul.mubr.bf16.gmra.mrb[0].mxu0 %v1238
  %v1360 = vpop.f32.mrb[0].mxu0
  %v1361 = vadd.f32 %v1260, %v1360
  %v1362 = vpop.f32.mrb[0].mxu0
  %v1363 = vpop.f32.mrb[0].mxu0
  %v1364 = vadd.f32 %v1260, %v1363
  %v1365 = vpop.f32.mrb[0].mxu0
  %1366 = vmatprep.mubr.bf16.mxu0 0
  %1367 = vmatmul.mubr.bf16.gmra.mrb[0].mxu0 %v1239
  %v1368 = vpop.f32.mrb[0].mxu0
  %v1369 = vadd.f32 %v1260, %v1368
  %v1370 = vpop.f32.mrb[0].mxu0
  %v1371 = vpop.f32.mrb[0].mxu0
  %v1372 = vadd.f32 %v1260, %v1371
  %v1373 = vpop.f32.mrb[0].mxu0
  %1374 = vdwg.mxu0
  %1375 = vst [vmem:[#allocation2] sm:$0xff] %v1345
  %1376 = vst [vmem:[#allocation2 + $0x8] sm:$0xff] %v1348
  %1377 = vst [vmem:[#allocation2 + $0x10] sm:$0xff] %v1353
  %1378 = vst [vmem:[#allocation2 + $0x18] sm:$0xff] %v1356
  %1379 = vst [vmem:[#allocation2 + $0x20] sm:$0xff] %v1361
  %1380 = vst [vmem:[#allocation2 + $0x28] sm:$0xff] %v1364
  %1381 = vst [vmem:[#allocation2 + $0x30] sm:$0xff] %v1369
  %1382 = vst [vmem:[#allocation2 + $0x38] sm:$0xff] %v1372
  %v1384 = vlaneseq
  %v1385 = vshrl.u32 %v1384, 7
  %v1386 = vsub.s32 0, %v1385
  %v1387 = vrot.slane %v1235, %v1386
  %v1389 = vld [vmem:[#allocation2] sm:$0xff]
  %v1390 = vld [vmem:[%s6] sm:$0xf]
  %v1391 = vld [vmem:[%s6 + $0x4] sm:$0xf]
  %v1392 = vld [vmem:[%s6 + $0x8] sm:$0xf]
  %v1393 = vld [vmem:[%s6 + $0xc] sm:$0xf]
  %v1394 = vld [vmem:[%s6 + $0x10] sm:$0xf]
  %v1395 = vld [vmem:[%s6 + $0x14] sm:$0xf]
  %v1396 = vld [vmem:[%s6 + $0x18] sm:$0xf]
  %v1397 = vld [vmem:[%s6 + $0x1c] sm:$0xf]
  %v1398 = vld [vmem:[%s6 + $0x20] sm:$0xf]
  %v1399 = vld [vmem:[%s6 + $0x24] sm:$0xf]
  %v1400 = vld [vmem:[%s6 + $0x28] sm:$0xf]
  %v1401 = vld [vmem:[%s6 + $0x2c] sm:$0xf]
  %v1402 = vld [vmem:[%s6 + $0x30] sm:$0xf]
  %v1403 = vld [vmem:[%s6 + $0x34] sm:$0xf]
  %v1404 = vld [vmem:[%s6 + $0x38] sm:$0xf]
  %v1405 = vld [vmem:[%s6 + $0x3c] sm:$0xf]
  %v1422 = vunpack.c.l.b16 %v1390
  %v1423 = vunpack.c.l.b16 %v1391
  %v1424 = vunpack.c.l.b16 %v1392
  %v1425 = vunpack.c.l.b16 %v1393
  %v1426 = vunpack.c.l.b16 %v1394
  %v1427 = vunpack.c.l.b16 %v1395
  %v1428 = vunpack.c.l.b16 %v1396
  %v1429 = vunpack.c.l.b16 %v1397
  %v1430 = vunpack.c.l.b16 %v1398
  %v1431 = vunpack.c.l.b16 %v1399
  %v1432 = vunpack.c.l.b16 %v1400
  %v1433 = vunpack.c.l.b16 %v1401
  %v1434 = vunpack.c.l.b16 %v1402
  %v1435 = vunpack.c.l.b16 %v1403
  %v1436 = vunpack.c.l.b16 %v1404
  %v1437 = vunpack.c.l.b16 %v1405
  %v1438 = vpack.c.b16 %v1423, %v1422
  %v1439 = vpack.c.b16 %v1425, %v1424
  %v1440 = vpack.c.b16 %v1427, %v1426
  %v1441 = vpack.c.b16 %v1429, %v1428
  %v1442 = vpack.c.b16 %v1431, %v1430
  %v1443 = vpack.c.b16 %v1433, %v1432
  %v1444 = vpack.c.b16 %v1435, %v1434
  %v1445 = vpack.c.b16 %v1437, %v1436
  %1454 = vmatprep.subr.bf16.mxu0 0
  %1455 = vmatpush1.bf16.msra.mxu0 %v1438
  %1456 = vmatprep.subr.bf16.mxu0 0
  %1457 = vmatpush1.bf16.msra.mxu0 %v1439
  %1458 = vmatprep.subr.bf16.mxu0 0
  %1459 = vmatpush1.bf16.msra.mxu0 %v1440
  %1460 = vmatprep.subr.bf16.mxu0 0
  %1461 = vmatpush1.bf16.msra.mxu0 %v1441
  %1462 = vmatprep.subr.bf16.mxu0 0
  %1463 = vmatpush1.bf16.msra.mxu0 %v1442
  %1464 = vmatprep.subr.bf16.mxu0 0
  %1465 = vmatpush1.bf16.msra.mxu0 %v1443
  %1466 = vmatprep.subr.bf16.mxu0 0
  %1467 = vmatpush1.bf16.msra.mxu0 %v1444
  %1468 = vmatprep.subr.bf16.mxu0 0
  %1469 = vmatpush1.bf16.msra.mxu0 %v1445
  %1470 = vmatprep.subr.bf16.mxu0 0
  %1471 = vmatpush1.bf16.msra.mxu0 0
  %1472 = vmatprep.subr.bf16.mxu0 0
  %1473 = vmatpush1.bf16.msra.mxu0 0
  %1474 = vmatprep.subr.bf16.mxu0 0
  %1475 = vmatpush1.bf16.msra.mxu0 0
  %1476 = vmatprep.subr.bf16.mxu0 0
  %1477 = vmatpush1.bf16.msra.mxu0 0
  %1478 = vmatprep.subr.bf16.mxu0 0
  %1479 = vmatpush1.bf16.msra.mxu0 0
  %1480 = vmatprep.subr.bf16.mxu0 0
  %1481 = vmatpush1.bf16.msra.mxu0 0
  %1482 = vmatprep.subr.bf16.mxu0 0
  %1483 = vmatpush1.bf16.msra.mxu0 0
  %1484 = vmatprep.subr.bf16.mxu0 0
  %1485 = vmatpush1.bf16.msra.mxu0 0
  %1486 = vmatprep.mubr.bf16.mxu0 0
  %1487 = vmatmul.mubr.bf16.gmra.mrb[0].mxu0 0
  %v1488 = vpop.f32.mrb[0].mxu0
  %v1489 = vadd.f32 0.0, %v1488
  %v1490 = vpop.f32.mrb[0].mxu0
  %v1491 = vpop.f32.mrb[0].mxu0
  %v1492 = vpop.f32.mrb[0].mxu0
  %1493 = vdwg.mxu0
  %v1494 = vadd.f32 %v1389, %v1489
  %v1495 = vxor.u32 %v1494, 2147483648
  %v1496 = vmul.f32 %v1495, 1.442695
  %v1497 = vpow.pop %v1496
  %v1498 = vadd.f32 %v1497, 1.0
  %v1499 = vrcp.pop %v1498
  %v1500 = vmul.f32 1.0, %v1499
  %1501 = vrot.lane.b32.xlu0 %v1500, 64
  %v1502 = vpop.permute.xlu0 %1501
  %1503 = vrot.lane.b32.xlu0 %v1500, 32
  %v1504 = vpop.permute.xlu0 %1503
  %v1505 = vadd.f32 %v1489, %v1387
  %v1506 = vmul.f32 %v1502, %v1505
  %v1507 = vadd.f32 %v1389, %v1506
  %v1508 = vtanh.pop %v1507
  %v1509 = vsub.f32 0.0, %v1508
  %v1510 = vmul.f32 %v1504, %v1509
  %v1511 = vadd.f32 %v1508, %v1510
  %v1512 = vld [vmem:[#allocation2 + $0x8] sm:$0xff]
  %v1513 = vpack.c.bf16 %v1511, %v1511
  %1514 = vmatprep.subr.bf16.mxu0 0
  %1515 = vmatpush1.bf16.msra.mxu0 %v1438
  %1516 = vmatprep.subr.bf16.mxu0 0
  %1517 = vmatpush1.bf16.msra.mxu0 %v1439
  %1518 = vmatprep.subr.bf16.mxu0 0
  %1519 = vmatpush1.bf16.msra.mxu0 %v1440
  %1520 = vmatprep.subr.bf16.mxu0 0
  %1521 = vmatpush1.bf16.msra.mxu0 %v1441
  %1522 = vmatprep.subr.bf16.mxu0 0
  %1523 = vmatpush1.bf16.msra.mxu0 %v1442
  %1524 = vmatprep.subr.bf16.mxu0 0
  %1525 = vmatpush1.bf16.msra.mxu0 %v1443
  %1526 = vmatprep.subr.bf16.mxu0 0
  %1527 = vmatpush1.bf16.msra.mxu0 %v1444
  %1528 = vmatprep.subr.bf16.mxu0 0
  %1529 = vmatpush1.bf16.msra.mxu0 %v1445
  %1530 = vmatprep.subr.bf16.mxu0 0
  %1531 = vmatpush1.bf16.msra.mxu0 0
  %1532 = vmatprep.subr.bf16.mxu0 0
  %1533 = vmatpush1.bf16.msra.mxu0 0
  %1534 = vmatprep.subr.bf16.mxu0 0
  %1535 = vmatpush1.bf16.msra.mxu0 0
  %1536 = vmatprep.subr.bf16.mxu0 0
  %1537 = vmatpush1.bf16.msra.mxu0 0
  %1538 = vmatprep.subr.bf16.mxu0 0
  %1539 = vmatpush1.bf16.msra.mxu0 0
  %1540 = vmatprep.subr.bf16.mxu0 0
  %1541 = vmatpush1.bf16.msra.mxu0 0
  %1542 = vmatprep.subr.bf16.mxu0 0
  %1543 = vmatpush1.bf16.msra.mxu0 0
  %1544 = vmatprep.subr.bf16.mxu0 0
  %1545 = vmatpush1.bf16.msra.mxu0 0
  %1546 = vmatprep.mubr.bf16.mxu0 0
  %1547 = vmatmul.mubr.bf16.gmra.mrb[0].mxu0 %v1513
  %v1548 = vpop.f32.mrb[0].mxu0
  %v1549 = vadd.f32 0.0, %v1548
  %v1550 = vpop.f32.mrb[0].mxu0
  %v1551 = vpop.f32.mrb[0].mxu0
  %v1552 = vpop.f32.mrb[0].mxu0
  %1553 = vdwg.mxu0
  %v1554 = vadd.f32 %v1512, %v1549
  %v1555 = vxor.u32 %v1554, 2147483648
  %v1556 = vmul.f32 %v1555, 1.442695
  %v1557 = vpow.pop %v1556
  %v1558 = vadd.f32 %v1557, 1.0
  %v1559 = vrcp.pop %v1558
  %v1560 = vmul.f32 1.0, %v1559
  %1561 = vrot.lane.b32.xlu0 %v1560, 64
  %v1562 = vpop.permute.xlu0 %1561
  %1563 = vrot.lane.b32.xlu0 %v1560, 32
  %v1564 = vpop.permute.xlu0 %1563
  %v1565 = vadd.f32 %v1549, %v1387
  %v1566 = vmul.f32 %v1562, %v1565
  %v1567 = vadd.f32 %v1512, %v1566
  %v1568 = vtanh.pop %v1567
  %v1569 = vsub.f32 %v1511, %v1568
  %v1570 = vmul.f32 %v1564, %v1569
  %v1571 = vadd.f32 %v1568, %v1570
  %v1572 = vld [vmem:[#allocation2 + $0x10] sm:$0xff]
  %v1573 = vpack.c.bf16 %v1571, %v1571
  %1574 = vmatprep.subr.bf16.mxu0 0
  %1575 = vmatpush1.bf16.msra.mxu0 %v1438
  %1576 = vmatprep.subr.bf16.mxu0 0
  %1577 = vmatpush1.bf16.msra.mxu0 %v1439
  %1578 = vmatprep.subr.bf16.mxu0 0
  %1579 = vmatpush1.bf16.msra.mxu0 %v1440
  %1580 = vmatprep.subr.bf16.mxu0 0
  %1581 = vmatpush1.bf16.msra.mxu0 %v1441
  %1582 = vmatprep.subr.bf16.mxu0 0
  %1583 = vmatpush1.bf16.msra.mxu0 %v1442
  %1584 = vmatprep.subr.bf16.mxu0 0
  %1585 = vmatpush1.bf16.msra.mxu0 %v1443
  %1586 = vmatprep.subr.bf16.mxu0 0
  %1587 = vmatpush1.bf16.msra.mxu0 %v1444
  %1588 = vmatprep.subr.bf16.mxu0 0
  %1589 = vmatpush1.bf16.msra.mxu0 %v1445
  %1590 = vmatprep.subr.bf16.mxu0 0
  %1591 = vmatpush1.bf16.msra.mxu0 0
  %1592 = vmatprep.subr.bf16.mxu0 0
  %1593 = vmatpush1.bf16.msra.mxu0 0
  %1594 = vmatprep.subr.bf16.mxu0 0
  %1595 = vmatpush1.bf16.msra.mxu0 0
  %1596 = vmatprep.subr.bf16.mxu0 0
  %1597 = vmatpush1.bf16.msra.mxu0 0
  %1598 = vmatprep.subr.bf16.mxu0 0
  %1599 = vmatpush1.bf16.msra.mxu0 0
  %1600 = vmatprep.subr.bf16.mxu0 0
  %1601 = vmatpush1.bf16.msra.mxu0 0
  %1602 = vmatprep.subr.bf16.mxu0 0
  %1603 = vmatpush1.bf16.msra.mxu0 0
  %1604 = vmatprep.subr.bf16.mxu0 0
  %1605 = vmatpush1.bf16.msra.mxu0 0
  %1606 = vmatprep.mubr.bf16.mxu0 0
  %1607 = vmatmul.mubr.bf16.gmra.mrb[0].mxu0 %v1573
  %v1608 = vpop.f32.mrb[0].mxu0
  %v1609 = vadd.f32 0.0, %v1608
  %v1610 = vpop.f32.mrb[0].mxu0
  %v1611 = vpop.f32.mrb[0].mxu0
  %v1612 = vpop.f32.mrb[0].mxu0
  %1613 = vdwg.mxu0
  %v1614 = vadd.f32 %v1572, %v1609
  %v1615 = vxor.u32 %v1614, 2147483648
  %v1616 = vmul.f32 %v1615, 1.442695
  %v1617 = vpow.pop %v1616
  %v1618 = vadd.f32 %v1617, 1.0
  %v1619 = vrcp.pop %v1618
  %v1620 = vmul.f32 1.0, %v1619
  %1621 = vrot.lane.b32.xlu0 %v1620, 64
  %v1622 = vpop.permute.xlu0 %1621
  %1623 = vrot.lane.b32.xlu0 %v1620, 32
  %v1624 = vpop.permute.xlu0 %1623
  %v1625 = vadd.f32 %v1609, %v1387
  %v1626 = vmul.f32 %v1622, %v1625
  %v1627 = vadd.f32 %v1572, %v1626
  %v1628 = vtanh.pop %v1627
  %v1629 = vsub.f32 %v1571, %v1628
  %v1630 = vmul.f32 %v1624, %v1629
  %v1631 = vadd.f32 %v1628, %v1630
  %v1632 = vld [vmem:[#allocation2 + $0x18] sm:$0xff]
  %v1633 = vpack.c.bf16 %v1631, %v1631
  %1634 = vmatprep.subr.bf16.mxu0 0
  %1635 = vmatpush1.bf16.msra.mxu0 %v1438
  %1636 = vmatprep.subr.bf16.mxu0 0
  %1637 = vmatpush1.bf16.msra.mxu0 %v1439
  %1638 = vmatprep.subr.bf16.mxu0 0
  %1639 = vmatpush1.bf16.msra.mxu0 %v1440
  %1640 = vmatprep.subr.bf16.mxu0 0
  %1641 = vmatpush1.bf16.msra.mxu0 %v1441
  %1642 = vmatprep.subr.bf16.mxu0 0
  %1643 = vmatpush1.bf16.msra.mxu0 %v1442
  %1644 = vmatprep.subr.bf16.mxu0 0
  %1645 = vmatpush1.bf16.msra.mxu0 %v1443
  %1646 = vmatprep.subr.bf16.mxu0 0
  %1647 = vmatpush1.bf16.msra.mxu0 %v1444
  %1648 = vmatprep.subr.bf16.mxu0 0
  %1649 = vmatpush1.bf16.msra.mxu0 %v1445
  %1650 = vmatprep.subr.bf16.mxu0 0
  %1651 = vmatpush1.bf16.msra.mxu0 0
  %1652 = vmatprep.subr.bf16.mxu0 0
  %1653 = vmatpush1.bf16.msra.mxu0 0
  %1654 = vmatprep.subr.bf16.mxu0 0
  %1655 = vmatpush1.bf16.msra.mxu0 0
  %1656 = vmatprep.subr.bf16.mxu0 0
  %1657 = vmatpush1.bf16.msra.mxu0 0
  %1658 = vmatprep.subr.bf16.mxu0 0
  %1659 = vmatpush1.bf16.msra.mxu0 0
  %1660 = vmatprep.subr.bf16.mxu0 0
  %1661 = vmatpush1.bf16.msra.mxu0 0
  %1662 = vmatprep.subr.bf16.mxu0 0
  %1663 = vmatpush1.bf16.msra.mxu0 0
  %1664 = vmatprep.subr.bf16.mxu0 0
  %1665 = vmatpush1.bf16.msra.mxu0 0
  %1666 = vmatprep.mubr.bf16.mxu0 0
  %1667 = vmatmul.mubr.bf16.gmra.mrb[0].mxu0 %v1633
  %v1668 = vpop.f32.mrb[0].mxu0
  %v1669 = vadd.f32 0.0, %v1668
  %v1670 = vpop.f32.mrb[0].mxu0
  %v1671 = vpop.f32.mrb[0].mxu0
  %v1672 = vpop.f32.mrb[0].mxu0
  %1673 = vdwg.mxu0
  %v1674 = vadd.f32 %v1632, %v1669
  %v1675 = vxor.u32 %v1674, 2147483648
  %v1676 = vmul.f32 %v1675, 1.442695
  %v1677 = vpow.pop %v1676
  %v1678 = vadd.f32 %v1677, 1.0
  %v1679 = vrcp.pop %v1678
  %v1680 = vmul.f32 1.0, %v1679
  %1681 = vrot.lane.b32.xlu0 %v1680, 64
  %v1682 = vpop.permute.xlu0 %1681
  %1683 = vrot.lane.b32.xlu0 %v1680, 32
  %v1684 = vpop.permute.xlu0 %1683
  %v1685 = vadd.f32 %v1669, %v1387
  %v1686 = vmul.f32 %v1682, %v1685
  %v1687 = vadd.f32 %v1632, %v1686
  %v1688 = vtanh.pop %v1687
  %v1689 = vsub.f32 %v1631, %v1688
  %v1690 = vmul.f32 %v1684, %v1689
  %v1691 = vadd.f32 %v1688, %v1690
  %v1692 = vld [vmem:[#allocation2 + $0x20] sm:$0xff]
  %v1693 = vpack.c.bf16 %v1691, %v1691
  %1694 = vmatprep.subr.bf16.mxu0 0
  %1695 = vmatpush1.bf16.msra.mxu0 %v1438
  %1696 = vmatprep.subr.bf16.mxu0 0
  %1697 = vmatpush1.bf16.msra.mxu0 %v1439
  %1698 = vmatprep.subr.bf16.mxu0 0
  %1699 = vmatpush1.bf16.msra.mxu0 %v1440
  %1700 = vmatprep.subr.bf16.mxu0 0
  %1701 = vmatpush1.bf16.msra.mxu0 %v1441
  %1702 = vmatprep.subr.bf16.mxu0 0
  %1703 = vmatpush1.bf16.msra.mxu0 %v1442
  %1704 = vmatprep.subr.bf16.mxu0 0
  %1705 = vmatpush1.bf16.msra.mxu0 %v1443
  %1706 = vmatprep.subr.bf16.mxu0 0
  %1707 = vmatpush1.bf16.msra.mxu0 %v1444
  %1708 = vmatprep.subr.bf16.mxu0 0
  %1709 = vmatpush1.bf16.msra.mxu0 %v1445
  %1710 = vmatprep.subr.bf16.mxu0 0
  %1711 = vmatpush1.bf16.msra.mxu0 0
  %1712 = vmatprep.subr.bf16.mxu0 0
  %1713 = vmatpush1.bf16.msra.mxu0 0
  %1714 = vmatprep.subr.bf16.mxu0 0
  %1715 = vmatpush1.bf16.msra.mxu0 0
  %1716 = vmatprep.subr.bf16.mxu0 0
  %1717 = vmatpush1.bf16.msra.mxu0 0
  %1718 = vmatprep.subr.bf16.mxu0 0
  %1719 = vmatpush1.bf16.msra.mxu0 0
  %1720 = vmatprep.subr.bf16.mxu0 0
  %1721 = vmatpush1.bf16.msra.mxu0 0
  %1722 = vmatprep.subr.bf16.mxu0 0
  %1723 = vmatpush1.bf16.msra.mxu0 0
  %1724 = vmatprep.subr.bf16.mxu0 0
  %1725 = vmatpush1.bf16.msra.mxu0 0
  %1726 = vmatprep.mubr.bf16.mxu0 0
  %1727 = vmatmul.mubr.bf16.gmra.mrb[0].mxu0 %v1693
  %v1728 = vpop.f32.mrb[0].mxu0
  %v1729 = vadd.f32 0.0, %v1728
  %v1730 = vpop.f32.mrb[0].mxu0
  %v1731 = vpop.f32.mrb[0].mxu0
  %v1732 = vpop.f32.mrb[0].mxu0
  %1733 = vdwg.mxu0
  %v1734 = vadd.f32 %v1692, %v1729
  %v1735 = vxor.u32 %v1734, 2147483648
  %v1736 = vmul.f32 %v1735, 1.442695
  %v1737 = vpow.pop %v1736
  %v1738 = vadd.f32 %v1737, 1.0
  %v1739 = vrcp.pop %v1738
  %v1740 = vmul.f32 1.0, %v1739
  %1741 = vrot.lane.b32.xlu0 %v1740, 64
  %v1742 = vpop.permute.xlu0 %1741
  %1743 = vrot.lane.b32.xlu0 %v1740, 32
  %v1744 = vpop.permute.xlu0 %1743
  %v1745 = vadd.f32 %v1729, %v1387
  %v1746 = vmul.f32 %v1742, %v1745
  %v1747 = vadd.f32 %v1692, %v1746
  %v1748 = vtanh.pop %v1747
  %v1749 = vsub.f32 %v1691, %v1748
  %v1750 = vmul.f32 %v1744, %v1749
  %v1751 = vadd.f32 %v1748, %v1750
  %v1752 = vld [vmem:[#allocation2 + $0x28] sm:$0xff]
  %v1753 = vpack.c.bf16 %v1751, %v1751
  %1754 = vmatprep.subr.bf16.mxu0 0
  %1755 = vmatpush1.bf16.msra.mxu0 %v1438
  %1756 = vmatprep.subr.bf16.mxu0 0
  %1757 = vmatpush1.bf16.msra.mxu0 %v1439
  %1758 = vmatprep.subr.bf16.mxu0 0
  %1759 = vmatpush1.bf16.msra.mxu0 %v1440
  %1760 = vmatprep.subr.bf16.mxu0 0
  %1761 = vmatpush1.bf16.msra.mxu0 %v1441
  %1762 = vmatprep.subr.bf16.mxu0 0
  %1763 = vmatpush1.bf16.msra.mxu0 %v1442
  %1764 = vmatprep.subr.bf16.mxu0 0
  %1765 = vmatpush1.bf16.msra.mxu0 %v1443
  %1766 = vmatprep.subr.bf16.mxu0 0
  %1767 = vmatpush1.bf16.msra.mxu0 %v1444
  %1768 = vmatprep.subr.bf16.mxu0 0
  %1769 = vmatpush1.bf16.msra.mxu0 %v1445
  %1770 = vmatprep.subr.bf16.mxu0 0
  %1771 = vmatpush1.bf16.msra.mxu0 0
  %1772 = vmatprep.subr.bf16.mxu0 0
  %1773 = vmatpush1.bf16.msra.mxu0 0
  %1774 = vmatprep.subr.bf16.mxu0 0
  %1775 = vmatpush1.bf16.msra.mxu0 0
  %1776 = vmatprep.subr.bf16.mxu0 0
  %1777 = vmatpush1.bf16.msra.mxu0 0
  %1778 = vmatprep.subr.bf16.mxu0 0
  %1779 = vmatpush1.bf16.msra.mxu0 0
  %1780 = vmatprep.subr.bf16.mxu0 0
  %1781 = vmatpush1.bf16.msra.mxu0 0
  %1782 = vmatprep.subr.bf16.mxu0 0
  %1783 = vmatpush1.bf16.msra.mxu0 0
  %1784 = vmatprep.subr.bf16.mxu0 0
  %1785 = vmatpush1.bf16.msra.mxu0 0
  %1786 = vmatprep.mubr.bf16.mxu0 0
  %1787 = vmatmul.mubr.bf16.gmra.mrb[0].mxu0 %v1753
  %v1788 = vpop.f32.mrb[0].mxu0
  %v1789 = vadd.f32 0.0, %v1788
  %v1790 = vpop.f32.mrb[0].mxu0
  %v1791 = vpop.f32.mrb[0].mxu0
  %v1792 = vpop.f32.mrb[0].mxu0
  %1793 = vdwg.mxu0
  %v1794 = vadd.f32 %v1752, %v1789
  %v1795 = vxor.u32 %v1794, 2147483648
  %v1796 = vmul.f32 %v1795, 1.442695
  %v1797 = vpow.pop %v1796
  %v1798 = vadd.f32 %v1797, 1.0
  %v1799 = vrcp.pop %v1798
  %v1800 = vmul.f32 1.0, %v1799
  %1801 = vrot.lane.b32.xlu0 %v1800, 64
  %v1802 = vpop.permute.xlu0 %1801
  %1803 = vrot.lane.b32.xlu0 %v1800, 32
  %v1804 = vpop.permute.xlu0 %1803
  %v1805 = vadd.f32 %v1789, %v1387
  %v1806 = vmul.f32 %v1802, %v1805
  %v1807 = vadd.f32 %v1752, %v1806
  %v1808 = vtanh.pop %v1807
  %v1809 = vsub.f32 %v1751, %v1808
  %v1810 = vmul.f32 %v1804, %v1809
  %v1811 = vadd.f32 %v1808, %v1810
  %v1812 = vld [vmem:[#allocation2 + $0x30] sm:$0xff]
  %v1813 = vpack.c.bf16 %v1811, %v1811
  %1814 = vmatprep.subr.bf16.mxu0 0
  %1815 = vmatpush1.bf16.msra.mxu0 %v1438
  %1816 = vmatprep.subr.bf16.mxu0 0
  %1817 = vmatpush1.bf16.msra.mxu0 %v1439
  %1818 = vmatprep.subr.bf16.mxu0 0
  %1819 = vmatpush1.bf16.msra.mxu0 %v1440
  %1820 = vmatprep.subr.bf16.mxu0 0
  %1821 = vmatpush1.bf16.msra.mxu0 %v1441
  %1822 = vmatprep.subr.bf16.mxu0 0
  %1823 = vmatpush1.bf16.msra.mxu0 %v1442
  %1824 = vmatprep.subr.bf16.mxu0 0
  %1825 = vmatpush1.bf16.msra.mxu0 %v1443
  %1826 = vmatprep.subr.bf16.mxu0 0
  %1827 = vmatpush1.bf16.msra.mxu0 %v1444
  %1828 = vmatprep.subr.bf16.mxu0 0
  %1829 = vmatpush1.bf16.msra.mxu0 %v1445
  %1830 = vmatprep.subr.bf16.mxu0 0
  %1831 = vmatpush1.bf16.msra.mxu0 0
  %1832 = vmatprep.subr.bf16.mxu0 0
  %1833 = vmatpush1.bf16.msra.mxu0 0
  %1834 = vmatprep.subr.bf16.mxu0 0
  %1835 = vmatpush1.bf16.msra.mxu0 0
  %1836 = vmatprep.subr.bf16.mxu0 0
  %1837 = vmatpush1.bf16.msra.mxu0 0
  %1838 = vmatprep.subr.bf16.mxu0 0
  %1839 = vmatpush1.bf16.msra.mxu0 0
  %1840 = vmatprep.subr.bf16.mxu0 0
  %1841 = vmatpush1.bf16.msra.mxu0 0
  %1842 = vmatprep.subr.bf16.mxu0 0
  %1843 = vmatpush1.bf16.msra.mxu0 0
  %1844 = vmatprep.subr.bf16.mxu0 0
  %1845 = vmatpush1.bf16.msra.mxu0 0
  %1846 = vmatprep.mubr.bf16.mxu0 0
  %1847 = vmatmul.mubr.bf16.gmra.mrb[0].mxu0 %v1813
  %v1848 = vpop.f32.mrb[0].mxu0
  %v1849 = vadd.f32 0.0, %v1848
  %v1850 = vpop.f32.mrb[0].mxu0
  %v1851 = vpop.f32.mrb[0].mxu0
  %v1852 = vpop.f32.mrb[0].mxu0
  %1853 = vdwg.mxu0
  %v1854 = vadd.f32 %v1812, %v1849
  %v1855 = vxor.u32 %v1854, 2147483648
  %v1856 = vmul.f32 %v1855, 1.442695
  %v1857 = vpow.pop %v1856
  %v1858 = vadd.f32 %v1857, 1.0
  %v1859 = vrcp.pop %v1858
  %v1860 = vmul.f32 1.0, %v1859
  %1861 = vrot.lane.b32.xlu0 %v1860, 64
  %v1862 = vpop.permute.xlu0 %1861
  %1863 = vrot.lane.b32.xlu0 %v1860, 32
  %v1864 = vpop.permute.xlu0 %1863
  %v1865 = vadd.f32 %v1849, %v1387
  %v1866 = vmul.f32 %v1862, %v1865
  %v1867 = vadd.f32 %v1812, %v1866
  %v1868 = vtanh.pop %v1867
  %v1869 = vsub.f32 %v1811, %v1868
  %v1870 = vmul.f32 %v1864, %v1869
  %v1871 = vadd.f32 %v1868, %v1870
  %v1872 = vld [vmem:[#allocation2 + $0x38] sm:$0xff]
  %v1873 = vpack.c.bf16 %v1871, %v1871
  %1874 = vmatprep.subr.bf16.mxu0 0
  %1875 = vmatpush1.bf16.msra.mxu0 %v1438
  %1876 = vmatprep.subr.bf16.mxu0 0
  %1877 = vmatpush1.bf16.msra.mxu0 %v1439
  %1878 = vmatprep.subr.bf16.mxu0 0
  %1879 = vmatpush1.bf16.msra.mxu0 %v1440
  %1880 = vmatprep.subr.bf16.mxu0 0
  %1881 = vmatpush1.bf16.msra.mxu0 %v1441
  %1882 = vmatprep.subr.bf16.mxu0 0
  %1883 = vmatpush1.bf16.msra.mxu0 %v1442
  %1884 = vmatprep.subr.bf16.mxu0 0
  %1885 = vmatpush1.bf16.msra.mxu0 %v1443
  %1886 = vmatprep.subr.bf16.mxu0 0
  %1887 = vmatpush1.bf16.msra.mxu0 %v1444
  %1888 = vmatprep.subr.bf16.mxu0 0
  %1889 = vmatpush1.bf16.msra.mxu0 %v1445
  %1890 = vmatprep.subr.bf16.mxu0 0
  %1891 = vmatpush1.bf16.msra.mxu0 0
  %1892 = vmatprep.subr.bf16.mxu0 0
  %1893 = vmatpush1.bf16.msra.mxu0 0
  %1894 = vmatprep.subr.bf16.mxu0 0
  %1895 = vmatpush1.bf16.msra.mxu0 0
  %1896 = vmatprep.subr.bf16.mxu0 0
  %1897 = vmatpush1.bf16.msra.mxu0 0
  %1898 = vmatprep.subr.bf16.mxu0 0
  %1899 = vmatpush1.bf16.msra.mxu0 0
  %1900 = vmatprep.subr.bf16.mxu0 0
  %1901 = vmatpush1.bf16.msra.mxu0 0
  %1902 = vmatprep.subr.bf16.mxu0 0
  %1903 = vmatpush1.bf16.msra.mxu0 0
  %1904 = vmatprep.subr.bf16.mxu0 0
  %1905 = vmatpush1.bf16.msra.mxu0 0
  %1906 = vmatprep.mubr.bf16.mxu0 0
  %1907 = vmatmul.mubr.bf16.gmra.mrb[0].mxu0 %v1873
  %v1908 = vpop.f32.mrb[0].mxu0
  %v1909 = vadd.f32 0.0, %v1908
  %v1910 = vpop.f32.mrb[0].mxu0
  %v1911 = vpop.f32.mrb[0].mxu0
  %v1912 = vpop.f32.mrb[0].mxu0
  %1913 = vdwg.mxu0
  %v1914 = vadd.f32 %v1872, %v1909
  %v1915 = vxor.u32 %v1914, 2147483648
  %v1916 = vmul.f32 %v1915, 1.442695
  %v1917 = vpow.pop %v1916
  %v1918 = vadd.f32 %v1917, 1.0
  %v1919 = vrcp.pop %v1918
  %v1920 = vmul.f32 1.0, %v1919
  %1921 = vrot.lane.b32.xlu0 %v1920, 64
  %v1922 = vpop.permute.xlu0 %1921
  %1923 = vrot.lane.b32.xlu0 %v1920, 32
  %v1924 = vpop.permute.xlu0 %1923
  %v1925 = vadd.f32 %v1909, %v1387
  %v1926 = vmul.f32 %v1922, %v1925
  %v1927 = vadd.f32 %v1872, %v1926
  %v1928 = vtanh.pop %v1927
  %v1929 = vsub.f32 %v1871, %v1928
  %v1930 = vmul.f32 %v1924, %v1929
  %v1931 = vadd.f32 %v1928, %v1930
  %v1932 = vpack.c.bf16 %v1931, %v1931
  %v1933 = vld [vmem:[%s9] sm:$0xf]
  %v1934 = vld [vmem:[%s9 + $0x4] sm:$0xf]
  %v1935 = vld [vmem:[%s9 + $0x8] sm:$0xf]
  %v1936 = vld [vmem:[%s9 + $0xc] sm:$0xf]
  %v1937 = vld [vmem:[%s9 + $0x10] sm:$0xf]
  %v1938 = vld [vmem:[%s9 + $0x14] sm:$0xf]
  %v1939 = vld [vmem:[%s9 + $0x18] sm:$0xf]
  %v1940 = vld [vmem:[%s9 + $0x1c] sm:$0xf]
  %v1941 = vld [vmem:[%s9 + $0x20] sm:$0xf]
  %v1942 = vld [vmem:[%s9 + $0x24] sm:$0xf]
  %v1943 = vld [vmem:[%s9 + $0x28] sm:$0xf]
  %v1944 = vld [vmem:[%s9 + $0x2c] sm:$0xf]
  %v1945 = vld [vmem:[%s9 + $0x30] sm:$0xf]
  %v1946 = vld [vmem:[%s9 + $0x34] sm:$0xf]
  %v1947 = vld [vmem:[%s9 + $0x38] sm:$0xf]
  %v1948 = vld [vmem:[%s9 + $0x3c] sm:$0xf]
  %v1949 = vld [vmem:[%s10] sm:$0x1]
  %v1951 = vlaneseq
  %v1952 = vshrl.u32 %v1951, 7
  %v1953 = vsub.s32 0, %v1952
  %v1954 = vrot.slane %v1949, %v1953
  %v1972 = vunpack.c.l.b16 %v1933
  %v1973 = vunpack.c.l.b16 %v1934
  %v1974 = vunpack.c.l.b16 %v1935
  %v1975 = vunpack.c.l.b16 %v1936
  %v1976 = vunpack.c.l.b16 %v1937
  %v1977 = vunpack.c.l.b16 %v1938
  %v1978 = vunpack.c.l.b16 %v1939
  %v1979 = vunpack.c.l.b16 %v1940
  %v1980 = vunpack.c.l.b16 %v1941
  %v1981 = vunpack.c.l.b16 %v1942
  %v1982 = vunpack.c.l.b16 %v1943
  %v1983 = vunpack.c.l.b16 %v1944
  %v1984 = vunpack.c.l.b16 %v1945
  %v1985 = vunpack.c.l.b16 %v1946
  %v1986 = vunpack.c.l.b16 %v1947
  %v1987 = vunpack.c.l.b16 %v1948
  %v1988 = vpack.c.b16 %v1973, %v1972
  %v1989 = vpack.c.b16 %v1975, %v1974
  %v1990 = vpack.c.b16 %v1977, %v1976
  %v1991 = vpack.c.b16 %v1979, %v1978
  %v1992 = vpack.c.b16 %v1981, %v1980
  %v1993 = vpack.c.b16 %v1983, %v1982
  %v1994 = vpack.c.b16 %v1985, %v1984
  %v1995 = vpack.c.b16 %v1987, %v1986
  %2004 = vmatprep.subr.bf16.mxu0 0
  %2005 = vmatpush1.bf16.msra.mxu0 %v1988
  %2006 = vmatprep.subr.bf16.mxu0 0
  %2007 = vmatpush1.bf16.msra.mxu0 %v1989
  %2008 = vmatprep.subr.bf16.mxu0 0
  %2009 = vmatpush1.bf16.msra.mxu0 %v1990
  %2010 = vmatprep.subr.bf16.mxu0 0
  %2011 = vmatpush1.bf16.msra.mxu0 %v1991
  %2012 = vmatprep.subr.bf16.mxu0 0
  %2013 = vmatpush1.bf16.msra.mxu0 %v1992
  %2014 = vmatprep.subr.bf16.mxu0 0
  %2015 = vmatpush1.bf16.msra.mxu0 %v1993
  %2016 = vmatprep.subr.bf16.mxu0 0
  %2017 = vmatpush1.bf16.msra.mxu0 %v1994
  %2018 = vmatprep.subr.bf16.mxu0 0
  %2019 = vmatpush1.bf16.msra.mxu0 %v1995
  %2020 = vmatprep.subr.bf16.mxu0 0
  %2021 = vmatpush1.bf16.msra.mxu0 0
  %2022 = vmatprep.subr.bf16.mxu0 0
  %2023 = vmatpush1.bf16.msra.mxu0 0
  %2024 = vmatprep.subr.bf16.mxu0 0
  %2025 = vmatpush1.bf16.msra.mxu0 0
  %2026 = vmatprep.subr.bf16.mxu0 0
  %2027 = vmatpush1.bf16.msra.mxu0 0
  %2028 = vmatprep.subr.bf16.mxu0 0
  %2029 = vmatpush1.bf16.msra.mxu0 0
  %2030 = vmatprep.subr.bf16.mxu0 0
  %2031 = vmatpush1.bf16.msra.mxu0 0
  %2032 = vmatprep.subr.bf16.mxu0 0
  %2033 = vmatpush1.bf16.msra.mxu0 0
  %2034 = vmatprep.subr.bf16.mxu0 0
  %2035 = vmatpush1.bf16.msra.mxu0 0
  %2036 = vmatprep.mubr.bf16.mxu0 0
  %2037 = vmatmul.mubr.bf16.gmra.mrb[0].mxu0 %v1932
  %v2038 = vpop.f32.mrb[0].mxu0
  %v2039 = vadd.f32 %v1954, %v2038
  %v2040 = vpop.f32.mrb[0].mxu0
  %v2041 = vpop.f32.mrb[0].mxu0
  %v2042 = vpop.f32.mrb[0].mxu0
  %2043 = vdwg.mxu0
  %2044 = vst [vmem:[%s11] sm:$0xff] %v2039
  // Predicated region
  $region46: #{gru_model_forward.1} parent=0 // pred_check
    _
  $region47: #{gru_model_forward.1} parent=0 // pred_check_branch
    %2046 = sbr.rel (0) target = $region49
  $region48: #{gru_model_forward.1} parent=0 // pred_region
    _
  $region49: #{gru_model_forward.1} parent=0 // pred_fallthru
    _
  // Predicated region
  $region50: #{gru_model_forward.1} parent=0 // pred_check
    _
  $region51: #{gru_model_forward.1} parent=0 // pred_check_branch
    %2048 = sbr.rel (0) target = $region53
  $region52: #{gru_model_forward.1} parent=0 // pred_region
    _
  $region53: #{gru_model_forward.1} parent=0 // pred_fallthru
    _

</llo_original>
